<compile_context>
chip_gen: v6e
topology: v6e:2x2x1
jax: 0.10.0
libtpu: 0.0.40
codegen_flags: <defaults>
</compile_context>

<pallas_src>
import jax
import jax.numpy as jnp
from jax.experimental import pallas as pl
from jax.experimental.pallas import tpu as pltpu

IN_F = 28 * 28   # 784
HID = 512
OUT_F = 10
OUT_PAD = 128    # lane-dense padded logits width (sliced to OUT_F in the wrapper)


def mlp_kernel(x_ref, w1_ref, b1_ref, w2_ref, b2_ref, w3_ref, b3_ref, o_ref):
    # Fused MLP tile: three MXU matmuls (bf16 in, f32 accumulate) + VPU bias/ReLU.
    x = x_ref[...]                                                      # bf16 (TB, 784)
    h1 = jnp.dot(x, w1_ref[...], preferred_element_type=jnp.float32) + b1_ref[...]
    h1 = jnp.maximum(h1, 0.0).astype(jnp.bfloat16)                      # bf16 for next MXU pass
    h2 = jnp.dot(h1, w2_ref[...], preferred_element_type=jnp.float32) + b2_ref[...]
    h2 = jnp.maximum(h2, 0.0).astype(jnp.bfloat16)
    logits = jnp.dot(h2, w3_ref[...], preferred_element_type=jnp.float32) + b3_ref[...]
    o_ref[...] = logits.astype(o_ref.dtype)                             # lane-dense (TB, 128) f32 store


def _round_up(n, m):
    return (n + m - 1) // m * m


def neural_network_forward(x, params, tile_b=256):
    """x: (B, 1, 28, 28) or (B, 28, 28) float32. Returns logits (B, 10) float32."""
    w1, b1, w2, b2, w3, b3 = params
    B = x.shape[0]
    x_flat = x.reshape(B, -1).astype(jnp.bfloat16)      # nn.Flatten(): (B, 784), bf16 feed
    assert x_flat.shape[1] == IN_F

    # bf16 weights (f32 accumulation happens in-kernel); biases stay f32.
    w1b = w1.astype(jnp.bfloat16)
    w2b = w2.astype(jnp.bfloat16)
    b1f = b1.astype(jnp.float32)
    b2f = b2.astype(jnp.float32)
    # Pad the final layer to 128 output lanes for unmasked, lane-dense stores.
    w3b = jnp.zeros((HID, OUT_PAD), jnp.bfloat16).at[:, :OUT_F].set(w3.astype(jnp.bfloat16))
    b3p = jnp.zeros((1, OUT_PAD), jnp.float32).at[:, :OUT_F].set(b3.astype(jnp.float32))

    # Batch tiling: TB rows per grid step (256 saturates the 256x256 MXU on v6e/v7x;
    # small batches collapse to a single padded tile). Weights stay VMEM-resident.
    TB = min(tile_b, _round_up(B, 16))
    Bp = _round_up(B, TB)
    if Bp != B:
        x_flat = jnp.pad(x_flat, ((0, Bp - B), (0, 0)))
    grid = (Bp // TB,)

    flops = 2 * Bp * (IN_F * HID + HID * HID + HID * OUT_PAD)
    bytes_accessed = (
        x_flat.size * 2                                   # bf16 activations in
        + (w1b.size + w2b.size + w3b.size) * 2            # bf16 weights
        + (b1f.size + b2f.size + b3p.size) * 4            # f32 biases
        + Bp * OUT_PAD * 4                                # f32 logits out
    )

    out = pl.pallas_call(
        mlp_kernel,
        out_shape=jax.ShapeDtypeStruct((Bp, OUT_PAD), jnp.float32),
        grid=grid,
        in_specs=[
            pl.BlockSpec((TB, IN_F), lambda i: (i, 0)),        # streamed activation tile
            pl.BlockSpec((IN_F, HID), lambda i: (0, 0)),       # VMEM-resident weights
            pl.BlockSpec((1, HID), lambda i: (0, 0)),
            pl.BlockSpec((HID, HID), lambda i: (0, 0)),
            pl.BlockSpec((1, HID), lambda i: (0, 0)),
            pl.BlockSpec((HID, OUT_PAD), lambda i: (0, 0)),
            pl.BlockSpec((1, OUT_PAD), lambda i: (0, 0)),
        ],
        out_specs=pl.BlockSpec((TB, OUT_PAD), lambda i: (i, 0)),
        compiler_params=pltpu.CompilerParams(
            dimension_semantics=("parallel",),                 # v7x: shard batch tiles over both TCs
        ),
        cost_estimate=pl.CostEstimate(
            flops=flops, transcendentals=0, bytes_accessed=bytes_accessed),
    )(x_flat, w1b, b1f, w2b, b2f, w3b, b3p)

    return out[:B, :OUT_F]


def init_params(key):
    """Deterministic synthetic init (uniform, PyTorch-Linear-like scale), f32 master weights."""
    ks = jax.random.split(key, 6)

    def lin(kw, kb, fan_in, fan_out):
        bound = 1.0 / jnp.sqrt(fan_in)
        w = jax.random.uniform(kw, (fan_in, fan_out), jnp.float32, -bound, bound)
        b = jax.random.uniform(kb, (1, fan_out), jnp.float32, -bound, bound)
        return w, b

    w1, b1 = lin(ks[0], ks[1], IN_F, HID)
    w2, b2 = lin(ks[2], ks[3], HID, HID)
    w3, b3 = lin(ks[4], ks[5], HID, OUT_F)
    return (w1, b1, w2, b2, w3, b3)


if __name__ == "__main__":
    key = jax.random.PRNGKey(0)
    k_x, k_p = jax.random.split(key)
    params = init_params(k_p)

    B = 8
    x = jax.random.normal(k_x, (B, 1, 28, 28), jnp.float32)

    logits = neural_network_forward(x, params)
    logits = jax.block_until_ready(logits)
    assert logits.shape == (B, OUT_F)

    # Pure-JAX reference of the same bf16-weight / f32-accumulate forward pass.
    w1, b1, w2, b2, w3, b3 = params
    xf = x.reshape(B, -1)
    h = jnp.dot(xf.astype(jnp.bfloat16), w1.astype(jnp.bfloat16),
                preferred_element_type=jnp.float32) + b1
    h = jnp.maximum(h, 0.0)
    h = jnp.dot(h.astype(jnp.bfloat16), w2.astype(jnp.bfloat16),
                preferred_element_type=jnp.float32) + b2
    h = jnp.maximum(h, 0.0)
    ref = jnp.dot(h.astype(jnp.bfloat16), w3.astype(jnp.bfloat16),
                  preferred_element_type=jnp.float32) + b3
    assert jnp.allclose(logits, ref, atol=1e-2, rtol=1e-2)

    print("KERNEL_OK")
</pallas_src>

<mosaic_0001>
module attributes {stable_mosaic.version = 11 : i64} {
  func.func @mlp_kernel(%arg0: i32, %arg1: memref<16x784xbf16, #tpu.memory_space<vmem>>, %arg2: memref<784x512xbf16, #tpu.memory_space<vmem>>, %arg3: memref<1x512xf32, #tpu.memory_space<vmem>>, %arg4: memref<512x512xbf16, #tpu.memory_space<vmem>>, %arg5: memref<1x512xf32, #tpu.memory_space<vmem>>, %arg6: memref<512x128xbf16, #tpu.memory_space<vmem>>, %arg7: memref<1x128xf32, #tpu.memory_space<vmem>>, %arg8: memref<16x128xf32, #tpu.memory_space<vmem>>) attributes {dimension_semantics = [#tpu.dimension_semantics<parallel>], iteration_bounds = array<i64: 1>, scalar_prefetch = 0 : i64, scratch_operands = 0 : i64, tpu.core_type = #tpu.core_type<tc>, window_params = [{transform_indices = @transform_0, window_bounds = array<i64: 16, 784>}, {pipeline_mode = #tpu.pipeline_mode<synchronous>, transform_indices = @transform_1, window_bounds = array<i64: 784, 512>}, {pipeline_mode = #tpu.pipeline_mode<synchronous>, transform_indices = @transform_2, window_bounds = array<i64: 1, 512>}, {pipeline_mode = #tpu.pipeline_mode<synchronous>, transform_indices = @transform_3, window_bounds = array<i64: 512, 512>}, {pipeline_mode = #tpu.pipeline_mode<synchronous>, transform_indices = @transform_4, window_bounds = array<i64: 1, 512>}, {pipeline_mode = #tpu.pipeline_mode<synchronous>, transform_indices = @transform_5, window_bounds = array<i64: 512, 128>}, {pipeline_mode = #tpu.pipeline_mode<synchronous>, transform_indices = @transform_6, window_bounds = array<i64: 1, 128>}, {transform_indices = @transform_7, window_bounds = array<i64: 16, 128>}]} {
    %c0 = arith.constant 0 : index
    %c0_0 = arith.constant 0 : index
    %0 = vector.load %arg1[%c0, %c0_0] : memref<16x784xbf16, #tpu.memory_space<vmem>>, vector<16x784xbf16>
    %c0_1 = arith.constant 0 : index
    %c0_2 = arith.constant 0 : index
    %1 = vector.load %arg2[%c0_1, %c0_2] : memref<784x512xbf16, #tpu.memory_space<vmem>>, vector<784x512xbf16>
    %cst = arith.constant dense<0.000000e+00> : vector<16x512xf32>
    %2 = tpu.matmul %0, %1, %cst {dimension_numbers = #tpu.dot_dimension_numbers<[1], [0], [0], [1], [0, 0, 1, 1], [], []>} : vector<16x784xbf16>, vector<784x512xbf16>, vector<16x512xf32> -> vector<16x512xf32>
    %c0_3 = arith.constant 0 : index
    %c0_4 = arith.constant 0 : index
    %3 = vector.load %arg3[%c0_3, %c0_4] : memref<1x512xf32, #tpu.memory_space<vmem>>, vector<1x512xf32>
    %4 = vector.broadcast %3 : vector<1x512xf32> to vector<16x512xf32>
    %5 = arith.addf %2, %4 : vector<16x512xf32>
    %cst_5 = arith.constant 0.000000e+00 : f32
    %6 = vector.broadcast %cst_5 : f32 to vector<16x512xf32>
    %7 = arith.maximumf %5, %6 : vector<16x512xf32>
    %8 = arith.truncf %7 : vector<16x512xf32> to vector<16x512xbf16>
    %c0_6 = arith.constant 0 : index
    %c0_7 = arith.constant 0 : index
    %9 = vector.load %arg4[%c0_6, %c0_7] : memref<512x512xbf16, #tpu.memory_space<vmem>>, vector<512x512xbf16>
    %cst_8 = arith.constant dense<0.000000e+00> : vector<16x512xf32>
    %10 = tpu.matmul %8, %9, %cst_8 {dimension_numbers = #tpu.dot_dimension_numbers<[1], [0], [0], [1], [0, 0, 1, 1], [], []>} : vector<16x512xbf16>, vector<512x512xbf16>, vector<16x512xf32> -> vector<16x512xf32>
    %c0_9 = arith.constant 0 : index
    %c0_10 = arith.constant 0 : index
    %11 = vector.load %arg5[%c0_9, %c0_10] : memref<1x512xf32, #tpu.memory_space<vmem>>, vector<1x512xf32>
    %12 = vector.broadcast %11 : vector<1x512xf32> to vector<16x512xf32>
    %13 = arith.addf %10, %12 : vector<16x512xf32>
    %cst_11 = arith.constant 0.000000e+00 : f32
    %14 = vector.broadcast %cst_11 : f32 to vector<16x512xf32>
    %15 = arith.maximumf %13, %14 : vector<16x512xf32>
    %16 = arith.truncf %15 : vector<16x512xf32> to vector<16x512xbf16>
    %c0_12 = arith.constant 0 : index
    %c0_13 = arith.constant 0 : index
    %17 = vector.load %arg6[%c0_12, %c0_13] : memref<512x128xbf16, #tpu.memory_space<vmem>>, vector<512x128xbf16>
    %cst_14 = arith.constant dense<0.000000e+00> : vector<16x128xf32>
    %18 = tpu.matmul %16, %17, %cst_14 {dimension_numbers = #tpu.dot_dimension_numbers<[1], [0], [0], [1], [0, 0, 1, 1], [], []>} : vector<16x512xbf16>, vector<512x128xbf16>, vector<16x128xf32> -> vector<16x128xf32>
    %c0_15 = arith.constant 0 : index
    %c0_16 = arith.constant 0 : index
    %19 = vector.load %arg7[%c0_15, %c0_16] : memref<1x128xf32, #tpu.memory_space<vmem>>, vector<1x128xf32>
    %20 = vector.broadcast %19 : vector<1x128xf32> to vector<16x128xf32>
    %21 = arith.addf %18, %20 : vector<16x128xf32>
    %c0_17 = arith.constant 0 : index
    %c0_18 = arith.constant 0 : index
    %22 = vector.load %arg8[%c0_17, %c0_18] : memref<16x128xf32, #tpu.memory_space<vmem>>, vector<16x128xf32>
    tpu.vector_store %arg8[%c0_17, %c0_18], %21 {strides = array<i32>} : memref<16x128xf32, #tpu.memory_space<vmem>>, vector<16x128xf32>,
    return
  }
  func.func @transform_0(%arg0: i32) -> (i32, i32) {
    %c0_i32 = arith.constant 0 : i32
    %c0_i32_0 = arith.constant 0 : i32
    return %arg0, %c0_i32 : i32, i32
  }
  func.func @transform_1(%arg0: i32) -> (i32, i32) {
    %c0_i32 = arith.constant 0 : i32
    %c0_i32_0 = arith.constant 0 : i32
    %c0_i32_1 = arith.constant 0 : i32
    return %c0_i32, %c0_i32_0 : i32, i32
  }
  func.func @transform_2(%arg0: i32) -> (i32, i32) {
    %c0_i32 = arith.constant 0 : i32
    %c0_i32_0 = arith.constant 0 : i32
    %c0_i32_1 = arith.constant 0 : i32
    return %c0_i32, %c0_i32_0 : i32, i32
  }
  func.func @transform_3(%arg0: i32) -> (i32, i32) {
    %c0_i32 = arith.constant 0 : i32
    %c0_i32_0 = arith.constant 0 : i32
    %c0_i32_1 = arith.constant 0 : i32
    return %c0_i32, %c0_i32_0 : i32, i32
  }
  func.func @transform_4(%arg0: i32) -> (i32, i32) {
    %c0_i32 = arith.constant 0 : i32
    %c0_i32_0 = arith.constant 0 : i32
    %c0_i32_1 = arith.constant 0 : i32
    return %c0_i32, %c0_i32_0 : i32, i32
  }
  func.func @transform_5(%arg0: i32) -> (i32, i32) {
    %c0_i32 = arith.constant 0 : i32
    %c0_i32_0 = arith.constant 0 : i32
    %c0_i32_1 = arith.constant 0 : i32
    return %c0_i32, %c0_i32_0 : i32, i32
  }
  func.func @transform_6(%arg0: i32) -> (i32, i32) {
    %c0_i32 = arith.constant 0 : i32
    %c0_i32_0 = arith.constant 0 : i32
    %c0_i32_1 = arith.constant 0 : i32
    return %c0_i32, %c0_i32_0 : i32, i32
  }
  func.func @transform_7(%arg0: i32) -> (i32, i32) {
    %c0_i32 = arith.constant 0 : i32
    %c0_i32_0 = arith.constant 0 : i32
    return %arg0, %c0_i32 : i32, i32
  }
}

</mosaic_0001>

<llo_original>
// kernel: tpu_custom_call.1
$region0: #{tpu_custom_call.1}
  #allocation0 [shape = 'u32[]', space=smem, size = 0x4, offset = 0x4, fixed_abs, tag = 'smem constant byte address 0x4 - core index']
  #allocation1 [shape = 'u32[144,128]{1,0:T(1,128)}', space=vmem, size = 0x12000, scoped, tag = 'internal scratch']
  %s0 = inlined_call_operand.hbm [shape: bf16[16,784], index: 0, kind: input, shape index: {}]
  %s1 = inlined_call_operand.hbm [shape: bf16[784,512], index: 1, kind: input, shape index: {}]
  %s2 = inlined_call_operand.hbm [shape: f32[1,512], index: 2, kind: input, shape index: {}]
  %s3 = inlined_call_operand.hbm [shape: bf16[512,512], index: 3, kind: input, shape index: {}]
  %s4 = inlined_call_operand.vmem [shape: f32[1,512], index: 4, kind: input, shape index: {}]
  %s5 = inlined_call_operand.hbm [shape: bf16[512,128], index: 5, kind: input, shape index: {}]
  %s6 = inlined_call_operand.vmem [shape: f32[1,128], index: 6, kind: input, shape index: {}]
  %s7 = inlined_call_operand.hbm [shape: f32[16,128], index: 7, kind: output, shape index: {}]
  %s8 = sld [smem:[#allocation0]]
  $region58: #{tpu_custom_call.1} parent=0
    _
  %s10 = ssub.s32 1, %s8
  %s11 = scalar_select 0, %s10, %s8
  $region1: #{tpu_custom_call.1} parent=0
    #allocation2 [shape = 'u8[28672]{0}', space=vmem, size = 0x7000, scoped, tag = 'input window, operand 0, single buffered']
    #allocation3 [shape = 's32[1]{0}', space=sflag, size = 0x4, scoped, tag = 'scoped memory for tpu_custom_call.1']
    #allocation4 [shape = 's32[1]{0}', space=sflag, size = 0x4, scoped, tag = 'scoped memory for tpu_custom_call.1']
    #allocation5 [shape = 'u8[802816]{0}', space=vmem, size = 0xc4000, scoped, tag = 'input window, operand 1, single buffered']
    #allocation6 [shape = 's32[1]{0}', space=sflag, size = 0x4, scoped, tag = 'scoped memory for tpu_custom_call.1']
    #allocation7 [shape = 'u8[2048]{0}', space=vmem, size = 0x800, scoped, tag = 'input window, operand 2, single buffered']
    #allocation8 [shape = 'u8[524288]{0}', space=vmem, size = 0x80000, scoped, tag = 'input window, operand 3, single buffered']
    #allocation9 [shape = 's32[1]{0}', space=sflag, size = 0x4, scoped, tag = 'scoped memory for tpu_custom_call.1']
    #allocation10 [shape = 'u8[131072]{0}', space=vmem, size = 0x20000, scoped, tag = 'input window, operand 5, single buffered']
    #allocation11 [shape = 'u8[8192]{0}', space=vmem, size = 0x2000, scoped, tag = 'output window, operand 0, single buffered']
    %12 = vsyncpa [#allocation3], 0
    %13 = vsyncpa [#allocation6], 0
    %14 = vsyncpa [#allocation9], 0
    %15 = vsyncpa [#allocation4], 0
    // Predicated region
    $region2: #{tpu_custom_call.1} parent=1 // pred_check
      _
    $region3: #{tpu_custom_call.1} parent=1 // pred_check_branch
      %17 = sbr.rel (0) target = $region5
    $region4: #{tpu_custom_call.1} parent=1 // pred_region
      %s19 = ssub.s32 896, 896
      %20 = vsyncadd [#allocation3], %s19
      %s21 = sshll.u32 [#allocation2], 4
      %s22 = int_to_ptr.vmem [resolvable:$true] %s21
      %27 = dma.hbm_to_vmem [thread:$0]  %s0, 896, %s22, [#allocation3], 448, 448, 28
    $region5: #{tpu_custom_call.1} parent=1 // pred_fallthru
      _
    // Predicated region
    $region6: #{tpu_custom_call.1} parent=1 // pred_check
      _
    $region7: #{tpu_custom_call.1} parent=1 // pred_check_branch
      %29 = sbr.rel (0) target = $region9
    $region8: #{tpu_custom_call.1} parent=1 // pred_region
      %s31 = ssub.s32 25088, 25088
      %32 = vsyncadd [#allocation6], %s31
      %s33 = sshll.u32 [#allocation5], 4
      %s34 = int_to_ptr.vmem [resolvable:$true] %s33
      %39 = dma.hbm_to_vmem [thread:$0]  %s1, 25088, %s34, [#allocation6], 256, 256, 16
    $region9: #{tpu_custom_call.1} parent=1 // pred_fallthru
      _
    // Predicated region
    $region10: #{tpu_custom_call.1} parent=1 // pred_check
      _
    $region11: #{tpu_custom_call.1} parent=1 // pred_check_branch
      %41 = sbr.rel (0) target = $region13
    $region12: #{tpu_custom_call.1} parent=1 // pred_region
      %s43 = ssub.s32 64, 64
      %44 = vsyncadd [#allocation6], %s43
      %s46 = sshll.u32 [#allocation7], 4
      %s47 = int_to_ptr.vmem [resolvable:$true] %s46
      %49 = dma.hbm_to_vmem [thread:$0]  %s2, 64, %s47, [#allocation6]
    $region13: #{tpu_custom_call.1} parent=1 // pred_fallthru
      _
    // Predicated region
    $region14: #{tpu_custom_call.1} parent=1 // pred_check
      _
    $region15: #{tpu_custom_call.1} parent=1 // pred_check_branch
      %51 = sbr.rel (0) target = $region17
    $region16: #{tpu_custom_call.1} parent=1 // pred_region
      %s53 = ssub.s32 16384, 16384
      %54 = vsyncadd [#allocation9], %s53
      %s55 = sshll.u32 [#allocation8], 4
      %s56 = int_to_ptr.vmem [resolvable:$true] %s55
      %61 = dma.hbm_to_vmem [thread:$0]  %s3, 16384, %s56, [#allocation9], 256, 256, 16
    $region17: #{tpu_custom_call.1} parent=1 // pred_fallthru
      _
    // Predicated region
    $region18: #{tpu_custom_call.1} parent=1 // pred_check
      _
    $region19: #{tpu_custom_call.1} parent=1 // pred_check_branch
      %63 = sbr.rel (0) target = $region21
    $region20: #{tpu_custom_call.1} parent=1 // pred_region
      _
    $region21: #{tpu_custom_call.1} parent=1 // pred_fallthru
      _
    // Predicated region
    $region22: #{tpu_custom_call.1} parent=1 // pred_check
      _
    $region23: #{tpu_custom_call.1} parent=1 // pred_check_branch
      %65 = sbr.rel (0) target = $region25
    $region24: #{tpu_custom_call.1} parent=1 // pred_region
      %s67 = ssub.s32 4096, 4096
      %68 = vsyncadd [#allocation9], %s67
      %s69 = sshll.u32 [#allocation10], 4
      %s70 = int_to_ptr.vmem [resolvable:$true] %s69
      %75 = dma.hbm_to_vmem [thread:$0]  %s5, 4096, %s70, [#allocation9], 64, 64, 4
    $region25: #{tpu_custom_call.1} parent=1 // pred_fallthru
      _
    // Predicated region
    $region26: #{tpu_custom_call.1} parent=1 // pred_check
      _
    $region27: #{tpu_custom_call.1} parent=1 // pred_check_branch
      %77 = sbr.rel (0) target = $region29
    $region28: #{tpu_custom_call.1} parent=1 // pred_region
      _
    $region29: #{tpu_custom_call.1} parent=1 // pred_fallthru
      _
    // Predicated region
    $region30: #{tpu_custom_call.1} parent=1 // pred_check
      _
    $region31: #{tpu_custom_call.1} parent=1 // pred_check_branch
      %79 = sbr.rel (0) target = $region33
    $region32: #{tpu_custom_call.1} parent=1 // pred_region
      %80 = dma.done [#allocation3], 896
    $region33: #{tpu_custom_call.1} parent=1 // pred_fallthru
      _
    // Predicated region
    $region34: #{tpu_custom_call.1} parent=1 // pred_check
      _
    $region35: #{tpu_custom_call.1} parent=1 // pred_check_branch
      %82 = sbr.rel (0) target = $region37
    $region36: #{tpu_custom_call.1} parent=1 // pred_region
      %83 = dma.done [#allocation6], 25088
    $region37: #{tpu_custom_call.1} parent=1 // pred_fallthru
      _
    // Predicated region
    $region38: #{tpu_custom_call.1} parent=1 // pred_check
      _
    $region39: #{tpu_custom_call.1} parent=1 // pred_check_branch
      %85 = sbr.rel (0) target = $region41
    $region40: #{tpu_custom_call.1} parent=1 // pred_region
      %86 = dma.done [#allocation6], 64
    $region41: #{tpu_custom_call.1} parent=1 // pred_fallthru
      _
    // Predicated region
    $region42: #{tpu_custom_call.1} parent=1 // pred_check
      _
    $region43: #{tpu_custom_call.1} parent=1 // pred_check_branch
      %88 = sbr.rel (0) target = $region45
    $region44: #{tpu_custom_call.1} parent=1 // pred_region
      %89 = dma.done [#allocation9], 16384
    $region45: #{tpu_custom_call.1} parent=1 // pred_fallthru
      _
    // Predicated region
    $region46: #{tpu_custom_call.1} parent=1 // pred_check
      _
    $region47: #{tpu_custom_call.1} parent=1 // pred_check_branch
      %91 = sbr.rel (0) target = $region49
    $region48: #{tpu_custom_call.1} parent=1 // pred_region
      %92 = dma.done [#allocation9], 4096
    $region49: #{tpu_custom_call.1} parent=1 // pred_fallthru
      _
    %v94 = vld [vmem:[#allocation2] sm:$0xff]
    %v95 = vld [vmem:[#allocation2 + $0x8] sm:$0xff]
    %v96 = vld [vmem:[#allocation2 + $0x10] sm:$0xff]
    %v97 = vld [vmem:[#allocation2 + $0x18] sm:$0xf]
    %v98 = vld [vmem:[#allocation2 + $0x1c] sm:$0xff]
    %v99 = vld [vmem:[#allocation2 + $0x24] sm:$0xff]
    %v100 = vld [vmem:[#allocation2 + $0x2c] sm:$0xff]
    %v101 = vld [vmem:[#allocation2 + $0x34] sm:$0xf]
    %v102 = vld [vmem:[#allocation5] sm:$0xff]
    %v103 = vld [vmem:[#allocation5 + $0x8] sm:$0xff]
    %v104 = vld [vmem:[#allocation5 + $0x10] sm:$0xff]
    %v105 = vld [vmem:[#allocation5 + $0x18] sm:$0xff]
    %v106 = vld [vmem:[#allocation5 + $0x20] sm:$0xff]
    %v107 = vld [vmem:[#allocation5 + $0x28] sm:$0xff]
    %v108 = vld [vmem:[#allocation5 + $0x30] sm:$0xff]
    %v109 = vld [vmem:[#allocation5 + $0x38] sm:$0xff]
    %v110 = vld [vmem:[#allocation5 + $0x40] sm:$0xff]
    %v111 = vld [vmem:[#allocation5 + $0x48] sm:$0xff]
    %v112 = vld [vmem:[#allocation5 + $0x50] sm:$0xff]
    %v113 = vld [vmem:[#allocation5 + $0x58] sm:$0xff]
    %v114 = vld [vmem:[#allocation5 + $0x60] sm:$0xff]
    %v115 = vld [vmem:[#allocation5 + $0x68] sm:$0xff]
    %v116 = vld [vmem:[#allocation5 + $0x70] sm:$0xff]
    %v117 = vld [vmem:[#allocation5 + $0x78] sm:$0xff]
    %v118 = vld [vmem:[#allocation5 + $0x80] sm:$0xff]
    %v119 = vld [vmem:[#allocation5 + $0x88] sm:$0xff]
    %v120 = vld [vmem:[#allocation5 + $0x90] sm:$0xff]
    %v121 = vld [vmem:[#allocation5 + $0x98] sm:$0xff]
    %v122 = vld [vmem:[#allocation5 + $0xa0] sm:$0xff]
    %v123 = vld [vmem:[#allocation5 + $0xa8] sm:$0xff]
    %v124 = vld [vmem:[#allocation5 + $0xb0] sm:$0xff]
    %v125 = vld [vmem:[#allocation5 + $0xb8] sm:$0xff]
    %v126 = vld [vmem:[#allocation5 + $0xc0] sm:$0xff]
    %v127 = vld [vmem:[#allocation5 + $0xc8] sm:$0xff]
    %v128 = vld [vmem:[#allocation5 + $0xd0] sm:$0xff]
    %v129 = vld [vmem:[#allocation5 + $0xd8] sm:$0xff]
    %v130 = vld [vmem:[#allocation5 + $0xe0] sm:$0xff]
    %v131 = vld [vmem:[#allocation5 + $0xe8] sm:$0xff]
    %v132 = vld [vmem:[#allocation5 + $0xf0] sm:$0xff]
    %v133 = vld [vmem:[#allocation5 + $0xf8] sm:$0xff]
    %v134 = vld [vmem:[#allocation5 + $0x100] sm:$0xff]
    %v135 = vld [vmem:[#allocation5 + $0x108] sm:$0xff]
    %v136 = vld [vmem:[#allocation5 + $0x110] sm:$0xff]
    %v137 = vld [vmem:[#allocation5 + $0x118] sm:$0xff]
    %v138 = vld [vmem:[#allocation5 + $0x120] sm:$0xff]
    %v139 = vld [vmem:[#allocation5 + $0x128] sm:$0xff]
    %v140 = vld [vmem:[#allocation5 + $0x130] sm:$0xff]
    %v141 = vld [vmem:[#allocation5 + $0x138] sm:$0xff]
    %v142 = vld [vmem:[#allocation5 + $0x140] sm:$0xff]
    %v143 = vld [vmem:[#allocation5 + $0x148] sm:$0xff]
    %v144 = vld [vmem:[#allocation5 + $0x150] sm:$0xff]
    %v145 = vld [vmem:[#allocation5 + $0x158] sm:$0xff]
    %v146 = vld [vmem:[#allocation5 + $0x160] sm:$0xff]
    %v147 = vld [vmem:[#allocation5 + $0x168] sm:$0xff]
    %v148 = vld [vmem:[#allocation5 + $0x170] sm:$0xff]
    %v149 = vld [vmem:[#allocation5 + $0x178] sm:$0xff]
    %v150 = vld [vmem:[#allocation5 + $0x180] sm:$0xff]
    %v151 = vld [vmem:[#allocation5 + $0x188] sm:$0xff]
    %v152 = vld [vmem:[#allocation5 + $0x190] sm:$0xff]
    %v153 = vld [vmem:[#allocation5 + $0x198] sm:$0xff]
    %v154 = vld [vmem:[#allocation5 + $0x1a0] sm:$0xff]
    %v155 = vld [vmem:[#allocation5 + $0x1a8] sm:$0xff]
    %v156 = vld [vmem:[#allocation5 + $0x1b0] sm:$0xff]
    %v157 = vld [vmem:[#allocation5 + $0x1b8] sm:$0xff]
    %v158 = vld [vmem:[#allocation5 + $0x1c0] sm:$0xff]
    %v159 = vld [vmem:[#allocation5 + $0x1c8] sm:$0xff]
    %v160 = vld [vmem:[#allocation5 + $0x1d0] sm:$0xff]
    %v161 = vld [vmem:[#allocation5 + $0x1d8] sm:$0xff]
    %v162 = vld [vmem:[#allocation5 + $0x1e0] sm:$0xff]
    %v163 = vld [vmem:[#allocation5 + $0x1e8] sm:$0xff]
    %v164 = vld [vmem:[#allocation5 + $0x1f0] sm:$0xff]
    %v165 = vld [vmem:[#allocation5 + $0x1f8] sm:$0xff]
    %v166 = vld [vmem:[#allocation5 + $0x200] sm:$0xff]
    %v167 = vld [vmem:[#allocation5 + $0x208] sm:$0xff]
    %v168 = vld [vmem:[#allocation5 + $0x210] sm:$0xff]
    %v169 = vld [vmem:[#allocation5 + $0x218] sm:$0xff]
    %v170 = vld [vmem:[#allocation5 + $0x220] sm:$0xff]
    %v171 = vld [vmem:[#allocation5 + $0x228] sm:$0xff]
    %v172 = vld [vmem:[#allocation5 + $0x230] sm:$0xff]
    %v173 = vld [vmem:[#allocation5 + $0x238] sm:$0xff]
    %v174 = vld [vmem:[#allocation5 + $0x240] sm:$0xff]
    %v175 = vld [vmem:[#allocation5 + $0x248] sm:$0xff]
    %v176 = vld [vmem:[#allocation5 + $0x250] sm:$0xff]
    %v177 = vld [vmem:[#allocation5 + $0x258] sm:$0xff]
    %v178 = vld [vmem:[#allocation5 + $0x260] sm:$0xff]
    %v179 = vld [vmem:[#allocation5 + $0x268] sm:$0xff]
    %v180 = vld [vmem:[#allocation5 + $0x270] sm:$0xff]
    %v181 = vld [vmem:[#allocation5 + $0x278] sm:$0xff]
    %v182 = vld [vmem:[#allocation5 + $0x280] sm:$0xff]
    %v183 = vld [vmem:[#allocation5 + $0x288] sm:$0xff]
    %v184 = vld [vmem:[#allocation5 + $0x290] sm:$0xff]
    %v185 = vld [vmem:[#allocation5 + $0x298] sm:$0xff]
    %v186 = vld [vmem:[#allocation5 + $0x2a0] sm:$0xff]
    %v187 = vld [vmem:[#allocation5 + $0x2a8] sm:$0xff]
    %v188 = vld [vmem:[#allocation5 + $0x2b0] sm:$0xff]
    %v189 = vld [vmem:[#allocation5 + $0x2b8] sm:$0xff]
    %v190 = vld [vmem:[#allocation5 + $0x2c0] sm:$0xff]
    %v191 = vld [vmem:[#allocation5 + $0x2c8] sm:$0xff]
    %v192 = vld [vmem:[#allocation5 + $0x2d0] sm:$0xff]
    %v193 = vld [vmem:[#allocation5 + $0x2d8] sm:$0xff]
    %v194 = vld [vmem:[#allocation5 + $0x2e0] sm:$0xff]
    %v195 = vld [vmem:[#allocation5 + $0x2e8] sm:$0xff]
    %v196 = vld [vmem:[#allocation5 + $0x2f0] sm:$0xff]
    %v197 = vld [vmem:[#allocation5 + $0x2f8] sm:$0xff]
    %v198 = vld [vmem:[#allocation5 + $0x300] sm:$0xff]
    %v199 = vld [vmem:[#allocation5 + $0x308] sm:$0xff]
    %v200 = vld [vmem:[#allocation5 + $0x310] sm:$0xff]
    %v201 = vld [vmem:[#allocation5 + $0x318] sm:$0xff]
    %v202 = vld [vmem:[#allocation5 + $0x320] sm:$0xff]
    %v203 = vld [vmem:[#allocation5 + $0x328] sm:$0xff]
    %v204 = vld [vmem:[#allocation5 + $0x330] sm:$0xff]
    %v205 = vld [vmem:[#allocation5 + $0x338] sm:$0xff]
    %v206 = vld [vmem:[#allocation5 + $0x340] sm:$0xff]
    %v207 = vld [vmem:[#allocation5 + $0x348] sm:$0xff]
    %v208 = vld [vmem:[#allocation5 + $0x350] sm:$0xff]
    %v209 = vld [vmem:[#allocation5 + $0x358] sm:$0xff]
    %v210 = vld [vmem:[#allocation5 + $0x360] sm:$0xff]
    %v211 = vld [vmem:[#allocation5 + $0x368] sm:$0xff]
    %v212 = vld [vmem:[#allocation5 + $0x370] sm:$0xff]
    %v213 = vld [vmem:[#allocation5 + $0x378] sm:$0xff]
    %v214 = vld [vmem:[#allocation5 + $0x380] sm:$0xff]
    %v215 = vld [vmem:[#allocation5 + $0x388] sm:$0xff]
    %v216 = vld [vmem:[#allocation5 + $0x390] sm:$0xff]
    %v217 = vld [vmem:[#allocation5 + $0x398] sm:$0xff]
    %v218 = vld [vmem:[#allocation5 + $0x3a0] sm:$0xff]
    %v219 = vld [vmem:[#allocation5 + $0x3a8] sm:$0xff]
    %v220 = vld [vmem:[#allocation5 + $0x3b0] sm:$0xff]
    %v221 = vld [vmem:[#allocation5 + $0x3b8] sm:$0xff]
    %v222 = vld [vmem:[#allocation5 + $0x3c0] sm:$0xff]
    %v223 = vld [vmem:[#allocation5 + $0x3c8] sm:$0xff]
    %v224 = vld [vmem:[#allocation5 + $0x3d0] sm:$0xff]
    %v225 = vld [vmem:[#allocation5 + $0x3d8] sm:$0xff]
    %v226 = vld [vmem:[#allocation5 + $0x3e0] sm:$0xff]
    %v227 = vld [vmem:[#allocation5 + $0x3e8] sm:$0xff]
    %v228 = vld [vmem:[#allocation5 + $0x3f0] sm:$0xff]
    %v229 = vld [vmem:[#allocation5 + $0x3f8] sm:$0xff]
    %v230 = vld [vmem:[#allocation5 + $0x400] sm:$0xff]
    %v231 = vld [vmem:[#allocation5 + $0x408] sm:$0xff]
    %v232 = vld [vmem:[#allocation5 + $0x410] sm:$0xff]
    %v233 = vld [vmem:[#allocation5 + $0x418] sm:$0xff]
    %v234 = vld [vmem:[#allocation5 + $0x420] sm:$0xff]
    %v235 = vld [vmem:[#allocation5 + $0x428] sm:$0xff]
    %v236 = vld [vmem:[#allocation5 + $0x430] sm:$0xff]
    %v237 = vld [vmem:[#allocation5 + $0x438] sm:$0xff]
    %v238 = vld [vmem:[#allocation5 + $0x440] sm:$0xff]
    %v239 = vld [vmem:[#allocation5 + $0x448] sm:$0xff]
    %v240 = vld [vmem:[#allocation5 + $0x450] sm:$0xff]
    %v241 = vld [vmem:[#allocation5 + $0x458] sm:$0xff]
    %v242 = vld [vmem:[#allocation5 + $0x460] sm:$0xff]
    %v243 = vld [vmem:[#allocation5 + $0x468] sm:$0xff]
    %v244 = vld [vmem:[#allocation5 + $0x470] sm:$0xff]
    %v245 = vld [vmem:[#allocation5 + $0x478] sm:$0xff]
    %v246 = vld [vmem:[#allocation5 + $0x480] sm:$0xff]
    %v247 = vld [vmem:[#allocation5 + $0x488] sm:$0xff]
    %v248 = vld [vmem:[#allocation5 + $0x490] sm:$0xff]
    %v249 = vld [vmem:[#allocation5 + $0x498] sm:$0xff]
    %v250 = vld [vmem:[#allocation5 + $0x4a0] sm:$0xff]
    %v251 = vld [vmem:[#allocation5 + $0x4a8] sm:$0xff]
    %v252 = vld [vmem:[#allocation5 + $0x4b0] sm:$0xff]
    %v253 = vld [vmem:[#allocation5 + $0x4b8] sm:$0xff]
    %v254 = vld [vmem:[#allocation5 + $0x4c0] sm:$0xff]
    %v255 = vld [vmem:[#allocation5 + $0x4c8] sm:$0xff]
    %v256 = vld [vmem:[#allocation5 + $0x4d0] sm:$0xff]
    %v257 = vld [vmem:[#allocation5 + $0x4d8] sm:$0xff]
    %v258 = vld [vmem:[#allocation5 + $0x4e0] sm:$0xff]
    %v259 = vld [vmem:[#allocation5 + $0x4e8] sm:$0xff]
    %v260 = vld [vmem:[#allocation5 + $0x4f0] sm:$0xff]
    %v261 = vld [vmem:[#allocation5 + $0x4f8] sm:$0xff]
    %v262 = vld [vmem:[#allocation5 + $0x500] sm:$0xff]
    %v263 = vld [vmem:[#allocation5 + $0x508] sm:$0xff]
    %v264 = vld [vmem:[#allocation5 + $0x510] sm:$0xff]
    %v265 = vld [vmem:[#allocation5 + $0x518] sm:$0xff]
    %v266 = vld [vmem:[#allocation5 + $0x520] sm:$0xff]
    %v267 = vld [vmem:[#allocation5 + $0x528] sm:$0xff]
    %v268 = vld [vmem:[#allocation5 + $0x530] sm:$0xff]
    %v269 = vld [vmem:[#allocation5 + $0x538] sm:$0xff]
    %v270 = vld [vmem:[#allocation5 + $0x540] sm:$0xff]
    %v271 = vld [vmem:[#allocation5 + $0x548] sm:$0xff]
    %v272 = vld [vmem:[#allocation5 + $0x550] sm:$0xff]
    %v273 = vld [vmem:[#allocation5 + $0x558] sm:$0xff]
    %v274 = vld [vmem:[#allocation5 + $0x560] sm:$0xff]
    %v275 = vld [vmem:[#allocation5 + $0x568] sm:$0xff]
    %v276 = vld [vmem:[#allocation5 + $0x570] sm:$0xff]
    %v277 = vld [vmem:[#allocation5 + $0x578] sm:$0xff]
    %v278 = vld [vmem:[#allocation5 + $0x580] sm:$0xff]
    %v279 = vld [vmem:[#allocation5 + $0x588] sm:$0xff]
    %v280 = vld [vmem:[#allocation5 + $0x590] sm:$0xff]
    %v281 = vld [vmem:[#allocation5 + $0x598] sm:$0xff]
    %v282 = vld [vmem:[#allocation5 + $0x5a0] sm:$0xff]
    %v283 = vld [vmem:[#allocation5 + $0x5a8] sm:$0xff]
    %v284 = vld [vmem:[#allocation5 + $0x5b0] sm:$0xff]
    %v285 = vld [vmem:[#allocation5 + $0x5b8] sm:$0xff]
    %v286 = vld [vmem:[#allocation5 + $0x5c0] sm:$0xff]
    %v287 = vld [vmem:[#allocation5 + $0x5c8] sm:$0xff]
    %v288 = vld [vmem:[#allocation5 + $0x5d0] sm:$0xff]
    %v289 = vld [vmem:[#allocation5 + $0x5d8] sm:$0xff]
    %v290 = vld [vmem:[#allocation5 + $0x5e0] sm:$0xff]
    %v291 = vld [vmem:[#allocation5 + $0x5e8] sm:$0xff]
    %v292 = vld [vmem:[#allocation5 + $0x5f0] sm:$0xff]
    %v293 = vld [vmem:[#allocation5 + $0x5f8] sm:$0xff]
    %v294 = vld [vmem:[#allocation5 + $0x600] sm:$0xff]
    %v295 = vld [vmem:[#allocation5 + $0x608] sm:$0xff]
    %v296 = vld [vmem:[#allocation5 + $0x610] sm:$0xff]
    %v297 = vld [vmem:[#allocation5 + $0x618] sm:$0xff]
    %v298 = vld [vmem:[#allocation7] sm:$0xf]
    %v300 = vlaneseq
    %v301 = vshrl.u32 %v300, 7
    %v302 = vsub.s32 0, %v301
    %v303 = vrot.slane %v298, %v302
    %v304 = vlaneseq
    %v305 = vshrl.u32 %v304, 7
    %v306 = vsub.s32 1, %v305
    %v307 = vrot.slane %v298, %v306
    %v308 = vlaneseq
    %v309 = vshrl.u32 %v308, 7
    %v310 = vsub.s32 2, %v309
    %v311 = vrot.slane %v298, %v310
    %v312 = vlaneseq
    %v313 = vshrl.u32 %v312, 7
    %v314 = vsub.s32 3, %v313
    %v315 = vrot.slane %v298, %v314
    %v328 = vunpack.c.l.b16 %v94
    %v329 = vunpack.c.h.b16 %v94
    %v330 = vunpack.c.l.b16 %v95
    %v331 = vunpack.c.h.b16 %v95
    %v332 = vunpack.c.l.b16 %v96
    %v333 = vunpack.c.h.b16 %v96
    %v334 = vunpack.c.l.b16 %v97
    %v335 = vunpack.c.l.b16 %v98
    %v336 = vunpack.c.h.b16 %v98
    %v337 = vunpack.c.l.b16 %v99
    %v338 = vunpack.c.h.b16 %v99
    %v339 = vunpack.c.l.b16 %v100
    %v340 = vunpack.c.h.b16 %v100
    %v341 = vunpack.c.l.b16 %v101
    %v342 = vpack.c.b16 %v335, %v328
    %v343 = vpack.c.b16 %v336, %v329
    %v344 = vpack.c.b16 %v337, %v330
    %v345 = vpack.c.b16 %v338, %v331
    %v346 = vpack.c.b16 %v339, %v332
    %v347 = vpack.c.b16 %v340, %v333
    %v348 = vpack.c.b16 %v341, %v334
    %v551 = vunpack.c.l.b16 %v102
    %v552 = vunpack.c.h.b16 %v102
    %v553 = vunpack.c.l.b16 %v103
    %v554 = vunpack.c.h.b16 %v103
    %v555 = vunpack.c.l.b16 %v104
    %v556 = vunpack.c.h.b16 %v104
    %v557 = vunpack.c.l.b16 %v105
    %v558 = vunpack.c.h.b16 %v105
    %v559 = vunpack.c.l.b16 %v106
    %v560 = vunpack.c.h.b16 %v106
    %v561 = vunpack.c.l.b16 %v107
    %v562 = vunpack.c.h.b16 %v107
    %v563 = vunpack.c.l.b16 %v108
    %v564 = vunpack.c.h.b16 %v108
    %v565 = vunpack.c.l.b16 %v109
    %v566 = vunpack.c.h.b16 %v109
    %v567 = vunpack.c.l.b16 %v110
    %v568 = vunpack.c.h.b16 %v110
    %v569 = vunpack.c.l.b16 %v111
    %v570 = vunpack.c.h.b16 %v111
    %v571 = vunpack.c.l.b16 %v112
    %v572 = vunpack.c.h.b16 %v112
    %v573 = vunpack.c.l.b16 %v113
    %v574 = vunpack.c.h.b16 %v113
    %v575 = vunpack.c.l.b16 %v114
    %v576 = vunpack.c.h.b16 %v114
    %v577 = vunpack.c.l.b16 %v115
    %v578 = vunpack.c.h.b16 %v115
    %v579 = vunpack.c.l.b16 %v116
    %v580 = vunpack.c.h.b16 %v116
    %v581 = vunpack.c.l.b16 %v117
    %v582 = vunpack.c.h.b16 %v117
    %v583 = vunpack.c.l.b16 %v118
    %v584 = vunpack.c.h.b16 %v118
    %v585 = vunpack.c.l.b16 %v119
    %v586 = vunpack.c.h.b16 %v119
    %v587 = vunpack.c.l.b16 %v120
    %v588 = vunpack.c.h.b16 %v120
    %v589 = vunpack.c.l.b16 %v121
    %v590 = vunpack.c.h.b16 %v121
    %v591 = vunpack.c.l.b16 %v122
    %v592 = vunpack.c.h.b16 %v122
    %v593 = vunpack.c.l.b16 %v123
    %v594 = vunpack.c.h.b16 %v123
    %v595 = vunpack.c.l.b16 %v124
    %v596 = vunpack.c.h.b16 %v124
    %v597 = vunpack.c.l.b16 %v125
    %v598 = vunpack.c.h.b16 %v125
    %v599 = vunpack.c.l.b16 %v126
    %v600 = vunpack.c.h.b16 %v126
    %v601 = vunpack.c.l.b16 %v127
    %v602 = vunpack.c.h.b16 %v127
    %v603 = vunpack.c.l.b16 %v128
    %v604 = vunpack.c.h.b16 %v128
    %v605 = vunpack.c.l.b16 %v129
    %v606 = vunpack.c.h.b16 %v129
    %v607 = vunpack.c.l.b16 %v130
    %v608 = vunpack.c.h.b16 %v130
    %v609 = vunpack.c.l.b16 %v131
    %v610 = vunpack.c.h.b16 %v131
    %v611 = vunpack.c.l.b16 %v132
    %v612 = vunpack.c.h.b16 %v132
    %v613 = vunpack.c.l.b16 %v133
    %v614 = vunpack.c.h.b16 %v133
    %v615 = vunpack.c.l.b16 %v134
    %v616 = vunpack.c.h.b16 %v134
    %v617 = vunpack.c.l.b16 %v135
    %v618 = vunpack.c.h.b16 %v135
    %v619 = vunpack.c.l.b16 %v136
    %v620 = vunpack.c.h.b16 %v136
    %v621 = vunpack.c.l.b16 %v137
    %v622 = vunpack.c.h.b16 %v137
    %v623 = vunpack.c.l.b16 %v138
    %v624 = vunpack.c.h.b16 %v138
    %v625 = vunpack.c.l.b16 %v139
    %v626 = vunpack.c.h.b16 %v139
    %v627 = vunpack.c.l.b16 %v140
    %v628 = vunpack.c.h.b16 %v140
    %v629 = vunpack.c.l.b16 %v141
    %v630 = vunpack.c.h.b16 %v141
    %v631 = vunpack.c.l.b16 %v142
    %v632 = vunpack.c.h.b16 %v142
    %v633 = vunpack.c.l.b16 %v143
    %v634 = vunpack.c.h.b16 %v143
    %v635 = vunpack.c.l.b16 %v144
    %v636 = vunpack.c.h.b16 %v144
    %v637 = vunpack.c.l.b16 %v145
    %v638 = vunpack.c.h.b16 %v145
    %v639 = vunpack.c.l.b16 %v146
    %v640 = vunpack.c.h.b16 %v146
    %v641 = vunpack.c.l.b16 %v147
    %v642 = vunpack.c.h.b16 %v147
    %v643 = vunpack.c.l.b16 %v148
    %v644 = vunpack.c.h.b16 %v148
    %v645 = vunpack.c.l.b16 %v149
    %v646 = vunpack.c.h.b16 %v149
    %v647 = vunpack.c.l.b16 %v150
    %v648 = vunpack.c.h.b16 %v150
    %v649 = vunpack.c.l.b16 %v151
    %v650 = vunpack.c.h.b16 %v151
    %v651 = vunpack.c.l.b16 %v152
    %v652 = vunpack.c.h.b16 %v152
    %v653 = vunpack.c.l.b16 %v153
    %v654 = vunpack.c.h.b16 %v153
    %v655 = vunpack.c.l.b16 %v154
    %v656 = vunpack.c.h.b16 %v154
    %v657 = vunpack.c.l.b16 %v155
    %v658 = vunpack.c.h.b16 %v155
    %v659 = vunpack.c.l.b16 %v156
    %v660 = vunpack.c.h.b16 %v156
    %v661 = vunpack.c.l.b16 %v157
    %v662 = vunpack.c.h.b16 %v157
    %v663 = vunpack.c.l.b16 %v158
    %v664 = vunpack.c.h.b16 %v158
    %v665 = vunpack.c.l.b16 %v159
    %v666 = vunpack.c.h.b16 %v159
    %v667 = vunpack.c.l.b16 %v160
    %v668 = vunpack.c.h.b16 %v160
    %v669 = vunpack.c.l.b16 %v161
    %v670 = vunpack.c.h.b16 %v161
    %v671 = vunpack.c.l.b16 %v162
    %v672 = vunpack.c.h.b16 %v162
    %v673 = vunpack.c.l.b16 %v163
    %v674 = vunpack.c.h.b16 %v163
    %v675 = vunpack.c.l.b16 %v164
    %v676 = vunpack.c.h.b16 %v164
    %v677 = vunpack.c.l.b16 %v165
    %v678 = vunpack.c.h.b16 %v165
    %v679 = vunpack.c.l.b16 %v166
    %v680 = vunpack.c.h.b16 %v166
    %v681 = vunpack.c.l.b16 %v167
    %v682 = vunpack.c.h.b16 %v167
    %v683 = vunpack.c.l.b16 %v168
    %v684 = vunpack.c.h.b16 %v168
    %v685 = vunpack.c.l.b16 %v169
    %v686 = vunpack.c.h.b16 %v169
    %v687 = vunpack.c.l.b16 %v170
    %v688 = vunpack.c.h.b16 %v170
    %v689 = vunpack.c.l.b16 %v171
    %v690 = vunpack.c.h.b16 %v171
    %v691 = vunpack.c.l.b16 %v172
    %v692 = vunpack.c.h.b16 %v172
    %v693 = vunpack.c.l.b16 %v173
    %v694 = vunpack.c.h.b16 %v173
    %v695 = vunpack.c.l.b16 %v174
    %v696 = vunpack.c.h.b16 %v174
    %v697 = vunpack.c.l.b16 %v175
    %v698 = vunpack.c.h.b16 %v175
    %v699 = vunpack.c.l.b16 %v176
    %v700 = vunpack.c.h.b16 %v176
    %v701 = vunpack.c.l.b16 %v177
    %v702 = vunpack.c.h.b16 %v177
    %v703 = vunpack.c.l.b16 %v178
    %v704 = vunpack.c.h.b16 %v178
    %v705 = vunpack.c.l.b16 %v179
    %v706 = vunpack.c.h.b16 %v179
    %v707 = vunpack.c.l.b16 %v180
    %v708 = vunpack.c.h.b16 %v180
    %v709 = vunpack.c.l.b16 %v181
    %v710 = vunpack.c.h.b16 %v181
    %v711 = vunpack.c.l.b16 %v182
    %v712 = vunpack.c.h.b16 %v182
    %v713 = vunpack.c.l.b16 %v183
    %v714 = vunpack.c.h.b16 %v183
    %v715 = vunpack.c.l.b16 %v184
    %v716 = vunpack.c.h.b16 %v184
    %v717 = vunpack.c.l.b16 %v185
    %v718 = vunpack.c.h.b16 %v185
    %v719 = vunpack.c.l.b16 %v186
    %v720 = vunpack.c.h.b16 %v186
    %v721 = vunpack.c.l.b16 %v187
    %v722 = vunpack.c.h.b16 %v187
    %v723 = vunpack.c.l.b16 %v188
    %v724 = vunpack.c.h.b16 %v188
    %v725 = vunpack.c.l.b16 %v189
    %v726 = vunpack.c.h.b16 %v189
    %v727 = vunpack.c.l.b16 %v190
    %v728 = vunpack.c.h.b16 %v190
    %v729 = vunpack.c.l.b16 %v191
    %v730 = vunpack.c.h.b16 %v191
    %v731 = vunpack.c.l.b16 %v192
    %v732 = vunpack.c.h.b16 %v192
    %v733 = vunpack.c.l.b16 %v193
    %v734 = vunpack.c.h.b16 %v193
    %v735 = vunpack.c.l.b16 %v194
    %v736 = vunpack.c.h.b16 %v194
    %v737 = vunpack.c.l.b16 %v195
    %v738 = vunpack.c.h.b16 %v195
    %v739 = vunpack.c.l.b16 %v196
    %v740 = vunpack.c.h.b16 %v196
    %v741 = vunpack.c.l.b16 %v197
    %v742 = vunpack.c.h.b16 %v197
    %v743 = vunpack.c.l.b16 %v198
    %v744 = vunpack.c.h.b16 %v198
    %v745 = vunpack.c.l.b16 %v199
    %v746 = vunpack.c.h.b16 %v199
    %v747 = vunpack.c.l.b16 %v200
    %v748 = vunpack.c.h.b16 %v200
    %v749 = vunpack.c.l.b16 %v201
    %v750 = vunpack.c.h.b16 %v201
    %v751 = vunpack.c.l.b16 %v202
    %v752 = vunpack.c.h.b16 %v202
    %v753 = vunpack.c.l.b16 %v203
    %v754 = vunpack.c.h.b16 %v203
    %v755 = vunpack.c.l.b16 %v204
    %v756 = vunpack.c.h.b16 %v204
    %v757 = vunpack.c.l.b16 %v205
    %v758 = vunpack.c.h.b16 %v205
    %v759 = vunpack.c.l.b16 %v206
    %v760 = vunpack.c.h.b16 %v206
    %v761 = vunpack.c.l.b16 %v207
    %v762 = vunpack.c.h.b16 %v207
    %v763 = vunpack.c.l.b16 %v208
    %v764 = vunpack.c.h.b16 %v208
    %v765 = vunpack.c.l.b16 %v209
    %v766 = vunpack.c.h.b16 %v209
    %v767 = vunpack.c.l.b16 %v210
    %v768 = vunpack.c.h.b16 %v210
    %v769 = vunpack.c.l.b16 %v211
    %v770 = vunpack.c.h.b16 %v211
    %v771 = vunpack.c.l.b16 %v212
    %v772 = vunpack.c.h.b16 %v212
    %v773 = vunpack.c.l.b16 %v213
    %v774 = vunpack.c.h.b16 %v213
    %v775 = vunpack.c.l.b16 %v214
    %v776 = vunpack.c.h.b16 %v214
    %v777 = vunpack.c.l.b16 %v215
    %v778 = vunpack.c.h.b16 %v215
    %v779 = vunpack.c.l.b16 %v216
    %v780 = vunpack.c.h.b16 %v216
    %v781 = vunpack.c.l.b16 %v217
    %v782 = vunpack.c.h.b16 %v217
    %v783 = vunpack.c.l.b16 %v218
    %v784 = vunpack.c.h.b16 %v218
    %v785 = vunpack.c.l.b16 %v219
    %v786 = vunpack.c.h.b16 %v219
    %v787 = vunpack.c.l.b16 %v220
    %v788 = vunpack.c.h.b16 %v220
    %v789 = vunpack.c.l.b16 %v221
    %v790 = vunpack.c.h.b16 %v221
    %v791 = vunpack.c.l.b16 %v222
    %v792 = vunpack.c.h.b16 %v222
    %v793 = vunpack.c.l.b16 %v223
    %v794 = vunpack.c.h.b16 %v223
    %v795 = vunpack.c.l.b16 %v224
    %v796 = vunpack.c.h.b16 %v224
    %v797 = vunpack.c.l.b16 %v225
    %v798 = vunpack.c.h.b16 %v225
    %v799 = vunpack.c.l.b16 %v226
    %v800 = vunpack.c.h.b16 %v226
    %v801 = vunpack.c.l.b16 %v227
    %v802 = vunpack.c.h.b16 %v227
    %v803 = vunpack.c.l.b16 %v228
    %v804 = vunpack.c.h.b16 %v228
    %v805 = vunpack.c.l.b16 %v229
    %v806 = vunpack.c.h.b16 %v229
    %v807 = vunpack.c.l.b16 %v230
    %v808 = vunpack.c.h.b16 %v230
    %v809 = vunpack.c.l.b16 %v231
    %v810 = vunpack.c.h.b16 %v231
    %v811 = vunpack.c.l.b16 %v232
    %v812 = vunpack.c.h.b16 %v232
    %v813 = vunpack.c.l.b16 %v233
    %v814 = vunpack.c.h.b16 %v233
    %v815 = vunpack.c.l.b16 %v234
    %v816 = vunpack.c.h.b16 %v234
    %v817 = vunpack.c.l.b16 %v235
    %v818 = vunpack.c.h.b16 %v235
    %v819 = vunpack.c.l.b16 %v236
    %v820 = vunpack.c.h.b16 %v236
    %v821 = vunpack.c.l.b16 %v237
    %v822 = vunpack.c.h.b16 %v237
    %v823 = vunpack.c.l.b16 %v238
    %v824 = vunpack.c.h.b16 %v238
    %v825 = vunpack.c.l.b16 %v239
    %v826 = vunpack.c.h.b16 %v239
    %v827 = vunpack.c.l.b16 %v240
    %v828 = vunpack.c.h.b16 %v240
    %v829 = vunpack.c.l.b16 %v241
    %v830 = vunpack.c.h.b16 %v241
    %v831 = vunpack.c.l.b16 %v242
    %v832 = vunpack.c.h.b16 %v242
    %v833 = vunpack.c.l.b16 %v243
    %v834 = vunpack.c.h.b16 %v243
    %v835 = vunpack.c.l.b16 %v244
    %v836 = vunpack.c.h.b16 %v244
    %v837 = vunpack.c.l.b16 %v245
    %v838 = vunpack.c.h.b16 %v245
    %v839 = vunpack.c.l.b16 %v246
    %v840 = vunpack.c.h.b16 %v246
    %v841 = vunpack.c.l.b16 %v247
    %v842 = vunpack.c.h.b16 %v247
    %v843 = vunpack.c.l.b16 %v248
    %v844 = vunpack.c.h.b16 %v248
    %v845 = vunpack.c.l.b16 %v249
    %v846 = vunpack.c.h.b16 %v249
    %v847 = vunpack.c.l.b16 %v250
    %v848 = vunpack.c.h.b16 %v250
    %v849 = vunpack.c.l.b16 %v251
    %v850 = vunpack.c.h.b16 %v251
    %v851 = vunpack.c.l.b16 %v252
    %v852 = vunpack.c.h.b16 %v252
    %v853 = vunpack.c.l.b16 %v253
    %v854 = vunpack.c.h.b16 %v253
    %v855 = vunpack.c.l.b16 %v254
    %v856 = vunpack.c.h.b16 %v254
    %v857 = vunpack.c.l.b16 %v255
    %v858 = vunpack.c.h.b16 %v255
    %v859 = vunpack.c.l.b16 %v256
    %v860 = vunpack.c.h.b16 %v256
    %v861 = vunpack.c.l.b16 %v257
    %v862 = vunpack.c.h.b16 %v257
    %v863 = vunpack.c.l.b16 %v258
    %v864 = vunpack.c.h.b16 %v258
    %v865 = vunpack.c.l.b16 %v259
    %v866 = vunpack.c.h.b16 %v259
    %v867 = vunpack.c.l.b16 %v260
    %v868 = vunpack.c.h.b16 %v260
    %v869 = vunpack.c.l.b16 %v261
    %v870 = vunpack.c.h.b16 %v261
    %v871 = vunpack.c.l.b16 %v262
    %v872 = vunpack.c.h.b16 %v262
    %v873 = vunpack.c.l.b16 %v263
    %v874 = vunpack.c.h.b16 %v263
    %v875 = vunpack.c.l.b16 %v264
    %v876 = vunpack.c.h.b16 %v264
    %v877 = vunpack.c.l.b16 %v265
    %v878 = vunpack.c.h.b16 %v265
    %v879 = vunpack.c.l.b16 %v266
    %v880 = vunpack.c.h.b16 %v266
    %v881 = vunpack.c.l.b16 %v267
    %v882 = vunpack.c.h.b16 %v267
    %v883 = vunpack.c.l.b16 %v268
    %v884 = vunpack.c.h.b16 %v268
    %v885 = vunpack.c.l.b16 %v269
    %v886 = vunpack.c.h.b16 %v269
    %v887 = vunpack.c.l.b16 %v270
    %v888 = vunpack.c.h.b16 %v270
    %v889 = vunpack.c.l.b16 %v271
    %v890 = vunpack.c.h.b16 %v271
    %v891 = vunpack.c.l.b16 %v272
    %v892 = vunpack.c.h.b16 %v272
    %v893 = vunpack.c.l.b16 %v273
    %v894 = vunpack.c.h.b16 %v273
    %v895 = vunpack.c.l.b16 %v274
    %v896 = vunpack.c.h.b16 %v274
    %v897 = vunpack.c.l.b16 %v275
    %v898 = vunpack.c.h.b16 %v275
    %v899 = vunpack.c.l.b16 %v276
    %v900 = vunpack.c.h.b16 %v276
    %v901 = vunpack.c.l.b16 %v277
    %v902 = vunpack.c.h.b16 %v277
    %v903 = vunpack.c.l.b16 %v278
    %v904 = vunpack.c.h.b16 %v278
    %v905 = vunpack.c.l.b16 %v279
    %v906 = vunpack.c.h.b16 %v279
    %v907 = vunpack.c.l.b16 %v280
    %v908 = vunpack.c.h.b16 %v280
    %v909 = vunpack.c.l.b16 %v281
    %v910 = vunpack.c.h.b16 %v281
    %v911 = vunpack.c.l.b16 %v282
    %v912 = vunpack.c.h.b16 %v282
    %v913 = vunpack.c.l.b16 %v283
    %v914 = vunpack.c.h.b16 %v283
    %v915 = vunpack.c.l.b16 %v284
    %v916 = vunpack.c.h.b16 %v284
    %v917 = vunpack.c.l.b16 %v285
    %v918 = vunpack.c.h.b16 %v285
    %v919 = vunpack.c.l.b16 %v286
    %v920 = vunpack.c.h.b16 %v286
    %v921 = vunpack.c.l.b16 %v287
    %v922 = vunpack.c.h.b16 %v287
    %v923 = vunpack.c.l.b16 %v288
    %v924 = vunpack.c.h.b16 %v288
    %v925 = vunpack.c.l.b16 %v289
    %v926 = vunpack.c.h.b16 %v289
    %v927 = vunpack.c.l.b16 %v290
    %v928 = vunpack.c.h.b16 %v290
    %v929 = vunpack.c.l.b16 %v291
    %v930 = vunpack.c.h.b16 %v291
    %v931 = vunpack.c.l.b16 %v292
    %v932 = vunpack.c.h.b16 %v292
    %v933 = vunpack.c.l.b16 %v293
    %v934 = vunpack.c.h.b16 %v293
    %v935 = vunpack.c.l.b16 %v294
    %v936 = vunpack.c.h.b16 %v294
    %v937 = vunpack.c.l.b16 %v295
    %v938 = vunpack.c.h.b16 %v295
    %v939 = vunpack.c.l.b16 %v296
    %v940 = vunpack.c.h.b16 %v296
    %v941 = vunpack.c.l.b16 %v297
    %v942 = vunpack.c.h.b16 %v297
    %v943 = vpack.c.b16 %v555, %v551
    %v944 = vpack.c.b16 %v556, %v552
    %v945 = vpack.c.b16 %v557, %v553
    %v946 = vpack.c.b16 %v558, %v554
    %v947 = vpack.c.b16 %v563, %v559
    %v948 = vpack.c.b16 %v564, %v560
    %v949 = vpack.c.b16 %v565, %v561
    %v950 = vpack.c.b16 %v566, %v562
    %v951 = vpack.c.b16 %v571, %v567
    %v952 = vpack.c.b16 %v572, %v568
    %v953 = vpack.c.b16 %v573, %v569
    %v954 = vpack.c.b16 %v574, %v570
    %v955 = vpack.c.b16 %v579, %v575
    %v956 = vpack.c.b16 %v580, %v576
    %v957 = vpack.c.b16 %v581, %v577
    %v958 = vpack.c.b16 %v582, %v578
    %v959 = vpack.c.b16 %v587, %v583
    %v960 = vpack.c.b16 %v588, %v584
    %v961 = vpack.c.b16 %v589, %v585
    %v962 = vpack.c.b16 %v590, %v586
    %v963 = vpack.c.b16 %v595, %v591
    %v964 = vpack.c.b16 %v596, %v592
    %v965 = vpack.c.b16 %v597, %v593
    %v966 = vpack.c.b16 %v598, %v594
    %v967 = vpack.c.b16 %v603, %v599
    %v968 = vpack.c.b16 %v604, %v600
    %v969 = vpack.c.b16 %v605, %v601
    %v970 = vpack.c.b16 %v606, %v602
    %v971 = vpack.c.b16 %v611, %v607
    %v972 = vpack.c.b16 %v612, %v608
    %v973 = vpack.c.b16 %v613, %v609
    %v974 = vpack.c.b16 %v614, %v610
    %v975 = vpack.c.b16 %v619, %v615
    %v976 = vpack.c.b16 %v620, %v616
    %v977 = vpack.c.b16 %v621, %v617
    %v978 = vpack.c.b16 %v622, %v618
    %v979 = vpack.c.b16 %v627, %v623
    %v980 = vpack.c.b16 %v628, %v624
    %v981 = vpack.c.b16 %v629, %v625
    %v982 = vpack.c.b16 %v630, %v626
    %v983 = vpack.c.b16 %v635, %v631
    %v984 = vpack.c.b16 %v636, %v632
    %v985 = vpack.c.b16 %v637, %v633
    %v986 = vpack.c.b16 %v638, %v634
    %v987 = vpack.c.b16 %v643, %v639
    %v988 = vpack.c.b16 %v644, %v640
    %v989 = vpack.c.b16 %v645, %v641
    %v990 = vpack.c.b16 %v646, %v642
    %v991 = vpack.c.b16 %v651, %v647
    %v992 = vpack.c.b16 %v652, %v648
    %v993 = vpack.c.b16 %v653, %v649
    %v994 = vpack.c.b16 %v654, %v650
    %v995 = vpack.c.b16 %v659, %v655
    %v996 = vpack.c.b16 %v660, %v656
    %v997 = vpack.c.b16 %v661, %v657
    %v998 = vpack.c.b16 %v662, %v658
    %v999 = vpack.c.b16 %v667, %v663
    %v1000 = vpack.c.b16 %v668, %v664
    %v1001 = vpack.c.b16 %v669, %v665
    %v1002 = vpack.c.b16 %v670, %v666
    %v1003 = vpack.c.b16 %v675, %v671
    %v1004 = vpack.c.b16 %v676, %v672
    %v1005 = vpack.c.b16 %v677, %v673
    %v1006 = vpack.c.b16 %v678, %v674
    %v1007 = vpack.c.b16 %v683, %v679
    %v1008 = vpack.c.b16 %v684, %v680
    %v1009 = vpack.c.b16 %v685, %v681
    %v1010 = vpack.c.b16 %v686, %v682
    %v1011 = vpack.c.b16 %v691, %v687
    %v1012 = vpack.c.b16 %v692, %v688
    %v1013 = vpack.c.b16 %v693, %v689
    %v1014 = vpack.c.b16 %v694, %v690
    %v1015 = vpack.c.b16 %v699, %v695
    %v1016 = vpack.c.b16 %v700, %v696
    %v1017 = vpack.c.b16 %v701, %v697
    %v1018 = vpack.c.b16 %v702, %v698
    %v1019 = vpack.c.b16 %v707, %v703
    %v1020 = vpack.c.b16 %v708, %v704
    %v1021 = vpack.c.b16 %v709, %v705
    %v1022 = vpack.c.b16 %v710, %v706
    %v1023 = vpack.c.b16 %v715, %v711
    %v1024 = vpack.c.b16 %v716, %v712
    %v1025 = vpack.c.b16 %v717, %v713
    %v1026 = vpack.c.b16 %v718, %v714
    %v1027 = vpack.c.b16 %v723, %v719
    %v1028 = vpack.c.b16 %v724, %v720
    %v1029 = vpack.c.b16 %v725, %v721
    %v1030 = vpack.c.b16 %v726, %v722
    %v1031 = vpack.c.b16 %v731, %v727
    %v1032 = vpack.c.b16 %v732, %v728
    %v1033 = vpack.c.b16 %v733, %v729
    %v1034 = vpack.c.b16 %v734, %v730
    %v1035 = vpack.c.b16 %v739, %v735
    %v1036 = vpack.c.b16 %v740, %v736
    %v1037 = vpack.c.b16 %v741, %v737
    %v1038 = vpack.c.b16 %v742, %v738
    %v1039 = vpack.c.b16 %v747, %v743
    %v1040 = vpack.c.b16 %v748, %v744
    %v1041 = vpack.c.b16 %v749, %v745
    %v1042 = vpack.c.b16 %v750, %v746
    %v1043 = vpack.c.b16 %v755, %v751
    %v1044 = vpack.c.b16 %v756, %v752
    %v1045 = vpack.c.b16 %v757, %v753
    %v1046 = vpack.c.b16 %v758, %v754
    %v1047 = vpack.c.b16 %v763, %v759
    %v1048 = vpack.c.b16 %v764, %v760
    %v1049 = vpack.c.b16 %v765, %v761
    %v1050 = vpack.c.b16 %v766, %v762
    %v1051 = vpack.c.b16 %v771, %v767
    %v1052 = vpack.c.b16 %v772, %v768
    %v1053 = vpack.c.b16 %v773, %v769
    %v1054 = vpack.c.b16 %v774, %v770
    %v1055 = vpack.c.b16 %v779, %v775
    %v1056 = vpack.c.b16 %v780, %v776
    %v1057 = vpack.c.b16 %v781, %v777
    %v1058 = vpack.c.b16 %v782, %v778
    %v1059 = vpack.c.b16 %v787, %v783
    %v1060 = vpack.c.b16 %v788, %v784
    %v1061 = vpack.c.b16 %v789, %v785
    %v1062 = vpack.c.b16 %v790, %v786
    %v1063 = vpack.c.b16 %v795, %v791
    %v1064 = vpack.c.b16 %v796, %v792
    %v1065 = vpack.c.b16 %v797, %v793
    %v1066 = vpack.c.b16 %v798, %v794
    %v1067 = vpack.c.b16 %v803, %v799
    %v1068 = vpack.c.b16 %v804, %v800
    %v1069 = vpack.c.b16 %v805, %v801
    %v1070 = vpack.c.b16 %v806, %v802
    %v1071 = vpack.c.b16 %v811, %v807
    %v1072 = vpack.c.b16 %v812, %v808
    %v1073 = vpack.c.b16 %v813, %v809
    %v1074 = vpack.c.b16 %v814, %v810
    %v1075 = vpack.c.b16 %v819, %v815
    %v1076 = vpack.c.b16 %v820, %v816
    %v1077 = vpack.c.b16 %v821, %v817
    %v1078 = vpack.c.b16 %v822, %v818
    %v1079 = vpack.c.b16 %v827, %v823
    %v1080 = vpack.c.b16 %v828, %v824
    %v1081 = vpack.c.b16 %v829, %v825
    %v1082 = vpack.c.b16 %v830, %v826
    %v1083 = vpack.c.b16 %v835, %v831
    %v1084 = vpack.c.b16 %v836, %v832
    %v1085 = vpack.c.b16 %v837, %v833
    %v1086 = vpack.c.b16 %v838, %v834
    %v1087 = vpack.c.b16 %v843, %v839
    %v1088 = vpack.c.b16 %v844, %v840
    %v1089 = vpack.c.b16 %v845, %v841
    %v1090 = vpack.c.b16 %v846, %v842
    %v1091 = vpack.c.b16 %v851, %v847
    %v1092 = vpack.c.b16 %v852, %v848
    %v1093 = vpack.c.b16 %v853, %v849
    %v1094 = vpack.c.b16 %v854, %v850
    %v1095 = vpack.c.b16 %v859, %v855
    %v1096 = vpack.c.b16 %v860, %v856
    %v1097 = vpack.c.b16 %v861, %v857
    %v1098 = vpack.c.b16 %v862, %v858
    %v1099 = vpack.c.b16 %v867, %v863
    %v1100 = vpack.c.b16 %v868, %v864
    %v1101 = vpack.c.b16 %v869, %v865
    %v1102 = vpack.c.b16 %v870, %v866
    %v1103 = vpack.c.b16 %v875, %v871
    %v1104 = vpack.c.b16 %v876, %v872
    %v1105 = vpack.c.b16 %v877, %v873
    %v1106 = vpack.c.b16 %v878, %v874
    %v1107 = vpack.c.b16 %v883, %v879
    %v1108 = vpack.c.b16 %v884, %v880
    %v1109 = vpack.c.b16 %v885, %v881
    %v1110 = vpack.c.b16 %v886, %v882
    %v1111 = vpack.c.b16 %v891, %v887
    %v1112 = vpack.c.b16 %v892, %v888
    %v1113 = vpack.c.b16 %v893, %v889
    %v1114 = vpack.c.b16 %v894, %v890
    %v1115 = vpack.c.b16 %v899, %v895
    %v1116 = vpack.c.b16 %v900, %v896
    %v1117 = vpack.c.b16 %v901, %v897
    %v1118 = vpack.c.b16 %v902, %v898
    %v1119 = vpack.c.b16 %v907, %v903
    %v1120 = vpack.c.b16 %v908, %v904
    %v1121 = vpack.c.b16 %v909, %v905
    %v1122 = vpack.c.b16 %v910, %v906
    %v1123 = vpack.c.b16 %v915, %v911
    %v1124 = vpack.c.b16 %v916, %v912
    %v1125 = vpack.c.b16 %v917, %v913
    %v1126 = vpack.c.b16 %v918, %v914
    %v1127 = vpack.c.b16 %v923, %v919
    %v1128 = vpack.c.b16 %v924, %v920
    %v1129 = vpack.c.b16 %v925, %v921
    %v1130 = vpack.c.b16 %v926, %v922
    %v1131 = vpack.c.b16 %v931, %v927
    %v1132 = vpack.c.b16 %v932, %v928
    %v1133 = vpack.c.b16 %v933, %v929
    %v1134 = vpack.c.b16 %v934, %v930
    %v1135 = vpack.c.b16 %v939, %v935
    %v1136 = vpack.c.b16 %v940, %v936
    %v1137 = vpack.c.b16 %v941, %v937
    %v1138 = vpack.c.b16 %v942, %v938
    %vm1335 = vcmask 130048
    %v1337 = vsel %vm1335, %v348, 0
    %1339 = vmatprep.subr.bf16.mxu0 %v972
    %1340 = vmatpush1.bf16.msra.mxu0 %v971
    %1341 = vmatprep.subr.bf16.mxu0 %v968
    %1342 = vmatpush1.bf16.msra.mxu0 %v967
    %1343 = vmatprep.subr.bf16.mxu0 %v964
    %1344 = vmatpush1.bf16.msra.mxu0 %v963
    %1345 = vmatprep.subr.bf16.mxu0 %v960
    %1346 = vmatpush1.bf16.msra.mxu0 %v959
    %1347 = vmatprep.subr.bf16.mxu0 %v956
    %1348 = vmatpush1.bf16.msra.mxu0 %v955
    %1349 = vmatprep.subr.bf16.mxu0 %v952
    %1350 = vmatpush1.bf16.msra.mxu0 %v951
    %1351 = vmatprep.subr.bf16.mxu0 %v948
    %1352 = vmatpush1.bf16.msra.mxu0 %v947
    %1353 = vmatprep.subr.bf16.mxu0 %v944
    %1354 = vmatpush1.bf16.msra.mxu0 %v943
    %1355 = vmatprep.subr.bf16.mxu0 %v1004
    %1356 = vmatpush2.bf16.msra.mxu0 %v1003
    %1357 = vmatprep.subr.bf16.mxu0 %v1000
    %1358 = vmatpush2.bf16.msra.mxu0 %v999
    %1359 = vmatprep.subr.bf16.mxu0 %v996
    %1360 = vmatpush2.bf16.msra.mxu0 %v995
    %1361 = vmatprep.subr.bf16.mxu0 %v992
    %1362 = vmatpush2.bf16.msra.mxu0 %v991
    %1363 = vmatprep.subr.bf16.mxu0 %v988
    %1364 = vmatpush2.bf16.msra.mxu0 %v987
    %1365 = vmatprep.subr.bf16.mxu0 %v984
    %1366 = vmatpush2.bf16.msra.mxu0 %v983
    %1367 = vmatprep.subr.bf16.mxu0 %v980
    %1368 = vmatpush2.bf16.msra.mxu0 %v979
    %1369 = vmatprep.subr.bf16.mxu0 %v976
    %1370 = vmatpush2.bf16.msra.mxu0 %v975
    %1371 = vmatprep.mubr.bf16.mxu0 %v343
    %1372 = vmatmul.mubr.bf16.gmra.mxu0 %v342
    %v1373 = vpop.f32.mrf.mxu0
    %v1374 = vadd.f32 %v303, %v1373
    %v1375 = vpop.f32.mrf.mxu0
    %v1376 = vadd.f32 %v307, %v1375
    %v1377 = vpop.f32.mrf.mxu0
    %v1378 = vadd.f32 %v303, %v1377
    %v1379 = vpop.f32.mrf.mxu0
    %v1380 = vadd.f32 %v307, %v1379
    %1381 = vdwg.mxu0
    %1382 = vmatprep.subr.bf16.mxu0 %v1036
    %1383 = vmatpush1.bf16.msra.mxu0 %v1035
    %1384 = vmatprep.subr.bf16.mxu0 %v1032
    %1385 = vmatpush1.bf16.msra.mxu0 %v1031
    %1386 = vmatprep.subr.bf16.mxu0 %v1028
    %1387 = vmatpush1.bf16.msra.mxu0 %v1027
    %1388 = vmatprep.subr.bf16.mxu0 %v1024
    %1389 = vmatpush1.bf16.msra.mxu0 %v1023
    %1390 = vmatprep.subr.bf16.mxu0 %v1020
    %1391 = vmatpush1.bf16.msra.mxu0 %v1019
    %1392 = vmatprep.subr.bf16.mxu0 %v1016
    %1393 = vmatpush1.bf16.msra.mxu0 %v1015
    %1394 = vmatprep.subr.bf16.mxu0 %v1012
    %1395 = vmatpush1.bf16.msra.mxu0 %v1011
    %1396 = vmatprep.subr.bf16.mxu0 %v1008
    %1397 = vmatpush1.bf16.msra.mxu0 %v1007
    %1398 = vmatprep.subr.bf16.mxu0 %v1068
    %1399 = vmatpush2.bf16.msra.mxu0 %v1067
    %1400 = vmatprep.subr.bf16.mxu0 %v1064
    %1401 = vmatpush2.bf16.msra.mxu0 %v1063
    %1402 = vmatprep.subr.bf16.mxu0 %v1060
    %1403 = vmatpush2.bf16.msra.mxu0 %v1059
    %1404 = vmatprep.subr.bf16.mxu0 %v1056
    %1405 = vmatpush2.bf16.msra.mxu0 %v1055
    %1406 = vmatprep.subr.bf16.mxu0 %v1052
    %1407 = vmatpush2.bf16.msra.mxu0 %v1051
    %1408 = vmatprep.subr.bf16.mxu0 %v1048
    %1409 = vmatpush2.bf16.msra.mxu0 %v1047
    %1410 = vmatprep.subr.bf16.mxu0 %v1044
    %1411 = vmatpush2.bf16.msra.mxu0 %v1043
    %1412 = vmatprep.subr.bf16.mxu0 %v1040
    %1413 = vmatpush2.bf16.msra.mxu0 %v1039
    %1414 = vmatprep.mubr.bf16.mxu0 %v345
    %1415 = vmatmul.mubr.bf16.gmra.mxu0 %v344
    %v1416 = vpop.f32.mrf.mxu0
    %v1417 = vadd.f32 %v1374, %v1416
    %v1418 = vpop.f32.mrf.mxu0
    %v1419 = vadd.f32 %v1376, %v1418
    %v1420 = vpop.f32.mrf.mxu0
    %v1421 = vadd.f32 %v1378, %v1420
    %v1422 = vpop.f32.mrf.mxu0
    %v1423 = vadd.f32 %v1380, %v1422
    %1424 = vdwg.mxu0
    %1425 = vmatprep.subr.bf16.mxu0 %v1100
    %1426 = vmatpush1.bf16.msra.mxu0 %v1099
    %1427 = vmatprep.subr.bf16.mxu0 %v1096
    %1428 = vmatpush1.bf16.msra.mxu0 %v1095
    %1429 = vmatprep.subr.bf16.mxu0 %v1092
    %1430 = vmatpush1.bf16.msra.mxu0 %v1091
    %1431 = vmatprep.subr.bf16.mxu0 %v1088
    %1432 = vmatpush1.bf16.msra.mxu0 %v1087
    %1433 = vmatprep.subr.bf16.mxu0 %v1084
    %1434 = vmatpush1.bf16.msra.mxu0 %v1083
    %1435 = vmatprep.subr.bf16.mxu0 %v1080
    %1436 = vmatpush1.bf16.msra.mxu0 %v1079
    %1437 = vmatprep.subr.bf16.mxu0 %v1076
    %1438 = vmatpush1.bf16.msra.mxu0 %v1075
    %1439 = vmatprep.subr.bf16.mxu0 %v1072
    %1440 = vmatpush1.bf16.msra.mxu0 %v1071
    %1441 = vmatprep.subr.bf16.mxu0 %v1132
    %1442 = vmatpush2.bf16.msra.mxu0 %v1131
    %1443 = vmatprep.subr.bf16.mxu0 %v1128
    %1444 = vmatpush2.bf16.msra.mxu0 %v1127
    %1445 = vmatprep.subr.bf16.mxu0 %v1124
    %1446 = vmatpush2.bf16.msra.mxu0 %v1123
    %1447 = vmatprep.subr.bf16.mxu0 %v1120
    %1448 = vmatpush2.bf16.msra.mxu0 %v1119
    %1449 = vmatprep.subr.bf16.mxu0 %v1116
    %1450 = vmatpush2.bf16.msra.mxu0 %v1115
    %1451 = vmatprep.subr.bf16.mxu0 %v1112
    %1452 = vmatpush2.bf16.msra.mxu0 %v1111
    %1453 = vmatprep.subr.bf16.mxu0 %v1108
    %1454 = vmatpush2.bf16.msra.mxu0 %v1107
    %1455 = vmatprep.subr.bf16.mxu0 %v1104
    %1456 = vmatpush2.bf16.msra.mxu0 %v1103
    %1457 = vmatprep.mubr.bf16.mxu0 %v347
    %1458 = vmatmul.mubr.bf16.gmra.mxu0 %v346
    %v1459 = vpop.f32.mrf.mxu0
    %v1460 = vadd.f32 %v1417, %v1459
    %v1461 = vpop.f32.mrf.mxu0
    %v1462 = vadd.f32 %v1419, %v1461
    %v1463 = vpop.f32.mrf.mxu0
    %v1464 = vadd.f32 %v1421, %v1463
    %v1465 = vpop.f32.mrf.mxu0
    %v1466 = vadd.f32 %v1423, %v1465
    %1467 = vdwg.mxu0
    %1468 = vmatprep.subr.bf16.mxu0 0
    %1469 = vmatpush1.bf16.msra.mxu0 0
    %1470 = vmatprep.subr.bf16.mxu0 0
    %1471 = vmatpush1.bf16.msra.mxu0 0
    %1472 = vmatprep.subr.bf16.mxu0 0
    %1473 = vmatpush1.bf16.msra.mxu0 0
    %1474 = vmatprep.subr.bf16.mxu0 0
    %1475 = vmatpush1.bf16.msra.mxu0 0
    %1476 = vmatprep.subr.bf16.mxu0 0
    %1477 = vmatpush1.bf16.msra.mxu0 0
    %1478 = vmatprep.subr.bf16.mxu0 0
    %1479 = vmatpush1.bf16.msra.mxu0 0
    %1480 = vmatprep.subr.bf16.mxu0 0
    %1481 = vmatpush1.bf16.msra.mxu0 0
    %1482 = vmatprep.subr.bf16.mxu0 %v1136
    %1483 = vmatpush1.bf16.msra.mxu0 %v1135
    %1484 = vmatprep.subr.bf16.mxu0 0
    %1485 = vmatpush2.bf16.msra.mxu0 0
    %1486 = vmatprep.subr.bf16.mxu0 0
    %1487 = vmatpush2.bf16.msra.mxu0 0
    %1488 = vmatprep.subr.bf16.mxu0 0
    %1489 = vmatpush2.bf16.msra.mxu0 0
    %1490 = vmatprep.subr.bf16.mxu0 0
    %1491 = vmatpush2.bf16.msra.mxu0 0
    %1492 = vmatprep.subr.bf16.mxu0 0
    %1493 = vmatpush2.bf16.msra.mxu0 0
    %1494 = vmatprep.subr.bf16.mxu0 0
    %1495 = vmatpush2.bf16.msra.mxu0 0
    %1496 = vmatprep.subr.bf16.mxu0 0
    %1497 = vmatpush2.bf16.msra.mxu0 0
    %1498 = vmatprep.subr.bf16.mxu0 0
    %1499 = vmatpush2.bf16.msra.mxu0 0
    %1500 = vmatprep.mubr.bf16.mxu0 0
    %1501 = vmatmul.mubr.bf16.gmra.mxu0 %v1337
    %v1502 = vpop.f32.mrf.mxu0
    %v1503 = vadd.f32 %v1460, %v1502
    %v1504 = vpop.f32.mrf.mxu0
    %v1505 = vadd.f32 %v1462, %v1504
    %v1506 = vpop.f32.mrf.mxu0
    %v1507 = vadd.f32 %v1464, %v1506
    %v1508 = vpop.f32.mrf.mxu0
    %v1509 = vadd.f32 %v1466, %v1508
    %1510 = vdwg.mxu0
    %1511 = vmatprep.subr.bf16.mxu0 %v974
    %1512 = vmatpush1.bf16.msra.mxu0 %v973
    %1513 = vmatprep.subr.bf16.mxu0 %v970
    %1514 = vmatpush1.bf16.msra.mxu0 %v969
    %1515 = vmatprep.subr.bf16.mxu0 %v966
    %1516 = vmatpush1.bf16.msra.mxu0 %v965
    %1517 = vmatprep.subr.bf16.mxu0 %v962
    %1518 = vmatpush1.bf16.msra.mxu0 %v961
    %1519 = vmatprep.subr.bf16.mxu0 %v958
    %1520 = vmatpush1.bf16.msra.mxu0 %v957
    %1521 = vmatprep.subr.bf16.mxu0 %v954
    %1522 = vmatpush1.bf16.msra.mxu0 %v953
    %1523 = vmatprep.subr.bf16.mxu0 %v950
    %1524 = vmatpush1.bf16.msra.mxu0 %v949
    %1525 = vmatprep.subr.bf16.mxu0 %v946
    %1526 = vmatpush1.bf16.msra.mxu0 %v945
    %1527 = vmatprep.subr.bf16.mxu0 %v1006
    %1528 = vmatpush2.bf16.msra.mxu0 %v1005
    %1529 = vmatprep.subr.bf16.mxu0 %v1002
    %1530 = vmatpush2.bf16.msra.mxu0 %v1001
    %1531 = vmatprep.subr.bf16.mxu0 %v998
    %1532 = vmatpush2.bf16.msra.mxu0 %v997
    %1533 = vmatprep.subr.bf16.mxu0 %v994
    %1534 = vmatpush2.bf16.msra.mxu0 %v993
    %1535 = vmatprep.subr.bf16.mxu0 %v990
    %1536 = vmatpush2.bf16.msra.mxu0 %v989
    %1537 = vmatprep.subr.bf16.mxu0 %v986
    %1538 = vmatpush2.bf16.msra.mxu0 %v985
    %1539 = vmatprep.subr.bf16.mxu0 %v982
    %1540 = vmatpush2.bf16.msra.mxu0 %v981
    %1541 = vmatprep.subr.bf16.mxu0 %v978
    %1542 = vmatpush2.bf16.msra.mxu0 %v977
    %1543 = vmatprep.mubr.bf16.mxu0 %v343
    %1544 = vmatmul.mubr.bf16.gmra.mxu0 %v342
    %v1545 = vpop.f32.mrf.mxu0
    %v1546 = vadd.f32 %v311, %v1545
    %v1547 = vpop.f32.mrf.mxu0
    %v1548 = vadd.f32 %v315, %v1547
    %v1549 = vpop.f32.mrf.mxu0
    %v1550 = vadd.f32 %v311, %v1549
    %v1551 = vpop.f32.mrf.mxu0
    %v1552 = vadd.f32 %v315, %v1551
    %1553 = vdwg.mxu0
    %1554 = vmatprep.subr.bf16.mxu0 %v1038
    %1555 = vmatpush1.bf16.msra.mxu0 %v1037
    %1556 = vmatprep.subr.bf16.mxu0 %v1034
    %1557 = vmatpush1.bf16.msra.mxu0 %v1033
    %1558 = vmatprep.subr.bf16.mxu0 %v1030
    %1559 = vmatpush1.bf16.msra.mxu0 %v1029
    %1560 = vmatprep.subr.bf16.mxu0 %v1026
    %1561 = vmatpush1.bf16.msra.mxu0 %v1025
    %1562 = vmatprep.subr.bf16.mxu0 %v1022
    %1563 = vmatpush1.bf16.msra.mxu0 %v1021
    %1564 = vmatprep.subr.bf16.mxu0 %v1018
    %1565 = vmatpush1.bf16.msra.mxu0 %v1017
    %1566 = vmatprep.subr.bf16.mxu0 %v1014
    %1567 = vmatpush1.bf16.msra.mxu0 %v1013
    %1568 = vmatprep.subr.bf16.mxu0 %v1010
    %1569 = vmatpush1.bf16.msra.mxu0 %v1009
    %1570 = vmatprep.subr.bf16.mxu0 %v1070
    %1571 = vmatpush2.bf16.msra.mxu0 %v1069
    %1572 = vmatprep.subr.bf16.mxu0 %v1066
    %1573 = vmatpush2.bf16.msra.mxu0 %v1065
    %1574 = vmatprep.subr.bf16.mxu0 %v1062
    %1575 = vmatpush2.bf16.msra.mxu0 %v1061
    %1576 = vmatprep.subr.bf16.mxu0 %v1058
    %1577 = vmatpush2.bf16.msra.mxu0 %v1057
    %1578 = vmatprep.subr.bf16.mxu0 %v1054
    %1579 = vmatpush2.bf16.msra.mxu0 %v1053
    %1580 = vmatprep.subr.bf16.mxu0 %v1050
    %1581 = vmatpush2.bf16.msra.mxu0 %v1049
    %1582 = vmatprep.subr.bf16.mxu0 %v1046
    %1583 = vmatpush2.bf16.msra.mxu0 %v1045
    %1584 = vmatprep.subr.bf16.mxu0 %v1042
    %1585 = vmatpush2.bf16.msra.mxu0 %v1041
    %1586 = vmatprep.mubr.bf16.mxu0 %v345
    %1587 = vmatmul.mubr.bf16.gmra.mxu0 %v344
    %v1588 = vpop.f32.mrf.mxu0
    %v1589 = vadd.f32 %v1546, %v1588
    %v1590 = vpop.f32.mrf.mxu0
    %v1591 = vadd.f32 %v1548, %v1590
    %v1592 = vpop.f32.mrf.mxu0
    %v1593 = vadd.f32 %v1550, %v1592
    %v1594 = vpop.f32.mrf.mxu0
    %v1595 = vadd.f32 %v1552, %v1594
    %1596 = vdwg.mxu0
    %1597 = vmatprep.subr.bf16.mxu0 %v1102
    %1598 = vmatpush1.bf16.msra.mxu0 %v1101
    %1599 = vmatprep.subr.bf16.mxu0 %v1098
    %1600 = vmatpush1.bf16.msra.mxu0 %v1097
    %1601 = vmatprep.subr.bf16.mxu0 %v1094
    %1602 = vmatpush1.bf16.msra.mxu0 %v1093
    %1603 = vmatprep.subr.bf16.mxu0 %v1090
    %1604 = vmatpush1.bf16.msra.mxu0 %v1089
    %1605 = vmatprep.subr.bf16.mxu0 %v1086
    %1606 = vmatpush1.bf16.msra.mxu0 %v1085
    %1607 = vmatprep.subr.bf16.mxu0 %v1082
    %1608 = vmatpush1.bf16.msra.mxu0 %v1081
    %1609 = vmatprep.subr.bf16.mxu0 %v1078
    %1610 = vmatpush1.bf16.msra.mxu0 %v1077
    %1611 = vmatprep.subr.bf16.mxu0 %v1074
    %1612 = vmatpush1.bf16.msra.mxu0 %v1073
    %1613 = vmatprep.subr.bf16.mxu0 %v1134
    %1614 = vmatpush2.bf16.msra.mxu0 %v1133
    %1615 = vmatprep.subr.bf16.mxu0 %v1130
    %1616 = vmatpush2.bf16.msra.mxu0 %v1129
    %1617 = vmatprep.subr.bf16.mxu0 %v1126
    %1618 = vmatpush2.bf16.msra.mxu0 %v1125
    %1619 = vmatprep.subr.bf16.mxu0 %v1122
    %1620 = vmatpush2.bf16.msra.mxu0 %v1121
    %1621 = vmatprep.subr.bf16.mxu0 %v1118
    %1622 = vmatpush2.bf16.msra.mxu0 %v1117
    %1623 = vmatprep.subr.bf16.mxu0 %v1114
    %1624 = vmatpush2.bf16.msra.mxu0 %v1113
    %1625 = vmatprep.subr.bf16.mxu0 %v1110
    %1626 = vmatpush2.bf16.msra.mxu0 %v1109
    %1627 = vmatprep.subr.bf16.mxu0 %v1106
    %1628 = vmatpush2.bf16.msra.mxu0 %v1105
    %1629 = vmatprep.mubr.bf16.mxu0 %v347
    %1630 = vmatmul.mubr.bf16.gmra.mxu0 %v346
    %v1631 = vpop.f32.mrf.mxu0
    %v1632 = vadd.f32 %v1589, %v1631
    %v1633 = vpop.f32.mrf.mxu0
    %v1634 = vadd.f32 %v1591, %v1633
    %v1635 = vpop.f32.mrf.mxu0
    %v1636 = vadd.f32 %v1593, %v1635
    %v1637 = vpop.f32.mrf.mxu0
    %v1638 = vadd.f32 %v1595, %v1637
    %1639 = vdwg.mxu0
    %1640 = vmatprep.subr.bf16.mxu0 0
    %1641 = vmatpush1.bf16.msra.mxu0 0
    %1642 = vmatprep.subr.bf16.mxu0 0
    %1643 = vmatpush1.bf16.msra.mxu0 0
    %1644 = vmatprep.subr.bf16.mxu0 0
    %1645 = vmatpush1.bf16.msra.mxu0 0
    %1646 = vmatprep.subr.bf16.mxu0 0
    %1647 = vmatpush1.bf16.msra.mxu0 0
    %1648 = vmatprep.subr.bf16.mxu0 0
    %1649 = vmatpush1.bf16.msra.mxu0 0
    %1650 = vmatprep.subr.bf16.mxu0 0
    %1651 = vmatpush1.bf16.msra.mxu0 0
    %1652 = vmatprep.subr.bf16.mxu0 0
    %1653 = vmatpush1.bf16.msra.mxu0 0
    %1654 = vmatprep.subr.bf16.mxu0 %v1138
    %1655 = vmatpush1.bf16.msra.mxu0 %v1137
    %1656 = vmatprep.subr.bf16.mxu0 0
    %1657 = vmatpush2.bf16.msra.mxu0 0
    %1658 = vmatprep.subr.bf16.mxu0 0
    %1659 = vmatpush2.bf16.msra.mxu0 0
    %1660 = vmatprep.subr.bf16.mxu0 0
    %1661 = vmatpush2.bf16.msra.mxu0 0
    %1662 = vmatprep.subr.bf16.mxu0 0
    %1663 = vmatpush2.bf16.msra.mxu0 0
    %1664 = vmatprep.subr.bf16.mxu0 0
    %1665 = vmatpush2.bf16.msra.mxu0 0
    %1666 = vmatprep.subr.bf16.mxu0 0
    %1667 = vmatpush2.bf16.msra.mxu0 0
    %1668 = vmatprep.subr.bf16.mxu0 0
    %1669 = vmatpush2.bf16.msra.mxu0 0
    %1670 = vmatprep.subr.bf16.mxu0 0
    %1671 = vmatpush2.bf16.msra.mxu0 0
    %1672 = vmatprep.mubr.bf16.mxu0 0
    %1673 = vmatmul.mubr.bf16.gmra.mxu0 %v1337
    %v1674 = vpop.f32.mrf.mxu0
    %v1675 = vadd.f32 %v1632, %v1674
    %v1676 = vpop.f32.mrf.mxu0
    %v1677 = vadd.f32 %v1634, %v1676
    %v1678 = vpop.f32.mrf.mxu0
    %v1679 = vadd.f32 %v1636, %v1678
    %v1680 = vpop.f32.mrf.mxu0
    %v1681 = vadd.f32 %v1638, %v1680
    %1682 = vdwg.mxu0
    %v1683 = vmax.f32 %v1503, 0.0
    %v1684 = vmax.f32 %v1505, 0.0
    %v1685 = vmax.f32 %v1675, 0.0
    %v1686 = vmax.f32 %v1677, 0.0
    %v1687 = vmax.f32 %v1507, 0.0
    %v1688 = vmax.f32 %v1509, 0.0
    %v1689 = vmax.f32 %v1679, 0.0
    %v1690 = vmax.f32 %v1681, 0.0
    %v1691 = vpack.c.bf16 %v1687, %v1683
    %v1692 = vpack.c.bf16 %v1688, %v1684
    %v1693 = vpack.c.bf16 %v1689, %v1685
    %v1694 = vpack.c.bf16 %v1690, %v1686
    %v1695 = vld [vmem:[#allocation8] sm:$0xff]
    %v1696 = vld [vmem:[#allocation8 + $0x8] sm:$0xff]
    %v1697 = vld [vmem:[#allocation8 + $0x10] sm:$0xff]
    %v1698 = vld [vmem:[#allocation8 + $0x18] sm:$0xff]
    %v1699 = vld [vmem:[#allocation8 + $0x20] sm:$0xff]
    %v1700 = vld [vmem:[#allocation8 + $0x28] sm:$0xff]
    %v1701 = vld [vmem:[#allocation8 + $0x30] sm:$0xff]
    %v1702 = vld [vmem:[#allocation8 + $0x38] sm:$0xff]
    %v1703 = vld [vmem:[#allocation8 + $0x40] sm:$0xff]
    %v1704 = vld [vmem:[#allocation8 + $0x48] sm:$0xff]
    %v1705 = vld [vmem:[#allocation8 + $0x50] sm:$0xff]
    %v1706 = vld [vmem:[#allocation8 + $0x58] sm:$0xff]
    %v1707 = vld [vmem:[#allocation8 + $0x60] sm:$0xff]
    %v1708 = vld [vmem:[#allocation8 + $0x68] sm:$0xff]
    %v1709 = vld [vmem:[#allocation8 + $0x70] sm:$0xff]
    %v1710 = vld [vmem:[#allocation8 + $0x78] sm:$0xff]
    %v1711 = vld [vmem:[#allocation8 + $0x80] sm:$0xff]
    %v1712 = vld [vmem:[#allocation8 + $0x88] sm:$0xff]
    %v1713 = vld [vmem:[#allocation8 + $0x90] sm:$0xff]
    %v1714 = vld [vmem:[#allocation8 + $0x98] sm:$0xff]
    %v1715 = vld [vmem:[#allocation8 + $0xa0] sm:$0xff]
    %v1716 = vld [vmem:[#allocation8 + $0xa8] sm:$0xff]
    %v1717 = vld [vmem:[#allocation8 + $0xb0] sm:$0xff]
    %v1718 = vld [vmem:[#allocation8 + $0xb8] sm:$0xff]
    %v1719 = vld [vmem:[#allocation8 + $0xc0] sm:$0xff]
    %v1720 = vld [vmem:[#allocation8 + $0xc8] sm:$0xff]
    %v1721 = vld [vmem:[#allocation8 + $0xd0] sm:$0xff]
    %v1722 = vld [vmem:[#allocation8 + $0xd8] sm:$0xff]
    %v1723 = vld [vmem:[#allocation8 + $0xe0] sm:$0xff]
    %v1724 = vld [vmem:[#allocation8 + $0xe8] sm:$0xff]
    %v1725 = vld [vmem:[#allocation8 + $0xf0] sm:$0xff]
    %v1726 = vld [vmem:[#allocation8 + $0xf8] sm:$0xff]
    %v1727 = vld [vmem:[#allocation8 + $0x100] sm:$0xff]
    %v1728 = vld [vmem:[#allocation8 + $0x108] sm:$0xff]
    %v1729 = vld [vmem:[#allocation8 + $0x110] sm:$0xff]
    %v1730 = vld [vmem:[#allocation8 + $0x118] sm:$0xff]
    %v1731 = vld [vmem:[#allocation8 + $0x120] sm:$0xff]
    %v1732 = vld [vmem:[#allocation8 + $0x128] sm:$0xff]
    %v1733 = vld [vmem:[#allocation8 + $0x130] sm:$0xff]
    %v1734 = vld [vmem:[#allocation8 + $0x138] sm:$0xff]
    %v1735 = vld [vmem:[#allocation8 + $0x140] sm:$0xff]
    %v1736 = vld [vmem:[#allocation8 + $0x148] sm:$0xff]
    %v1737 = vld [vmem:[#allocation8 + $0x150] sm:$0xff]
    %v1738 = vld [vmem:[#allocation8 + $0x158] sm:$0xff]
    %v1739 = vld [vmem:[#allocation8 + $0x160] sm:$0xff]
    %v1740 = vld [vmem:[#allocation8 + $0x168] sm:$0xff]
    %v1741 = vld [vmem:[#allocation8 + $0x170] sm:$0xff]
    %v1742 = vld [vmem:[#allocation8 + $0x178] sm:$0xff]
    %v1743 = vld [vmem:[#allocation8 + $0x180] sm:$0xff]
    %v1744 = vld [vmem:[#allocation8 + $0x188] sm:$0xff]
    %v1745 = vld [vmem:[#allocation8 + $0x190] sm:$0xff]
    %v1746 = vld [vmem:[#allocation8 + $0x198] sm:$0xff]
    %v1747 = vld [vmem:[#allocation8 + $0x1a0] sm:$0xff]
    %v1748 = vld [vmem:[#allocation8 + $0x1a8] sm:$0xff]
    %v1749 = vld [vmem:[#allocation8 + $0x1b0] sm:$0xff]
    %v1750 = vld [vmem:[#allocation8 + $0x1b8] sm:$0xff]
    %v1751 = vld [vmem:[#allocation8 + $0x1c0] sm:$0xff]
    %v1752 = vld [vmem:[#allocation8 + $0x1c8] sm:$0xff]
    %v1753 = vld [vmem:[#allocation8 + $0x1d0] sm:$0xff]
    %v1754 = vld [vmem:[#allocation8 + $0x1d8] sm:$0xff]
    %v1755 = vld [vmem:[#allocation8 + $0x1e0] sm:$0xff]
    %v1756 = vld [vmem:[#allocation8 + $0x1e8] sm:$0xff]
    %v1757 = vld [vmem:[#allocation8 + $0x1f0] sm:$0xff]
    %v1758 = vld [vmem:[#allocation8 + $0x1f8] sm:$0xff]
    %v1759 = vld [vmem:[#allocation8 + $0x200] sm:$0xff]
    %v1760 = vld [vmem:[#allocation8 + $0x208] sm:$0xff]
    %v1761 = vld [vmem:[#allocation8 + $0x210] sm:$0xff]
    %v1762 = vld [vmem:[#allocation8 + $0x218] sm:$0xff]
    %v1763 = vld [vmem:[#allocation8 + $0x220] sm:$0xff]
    %v1764 = vld [vmem:[#allocation8 + $0x228] sm:$0xff]
    %v1765 = vld [vmem:[#allocation8 + $0x230] sm:$0xff]
    %v1766 = vld [vmem:[#allocation8 + $0x238] sm:$0xff]
    %v1767 = vld [vmem:[#allocation8 + $0x240] sm:$0xff]
    %v1768 = vld [vmem:[#allocation8 + $0x248] sm:$0xff]
    %v1769 = vld [vmem:[#allocation8 + $0x250] sm:$0xff]
    %v1770 = vld [vmem:[#allocation8 + $0x258] sm:$0xff]
    %v1771 = vld [vmem:[#allocation8 + $0x260] sm:$0xff]
    %v1772 = vld [vmem:[#allocation8 + $0x268] sm:$0xff]
    %v1773 = vld [vmem:[#allocation8 + $0x270] sm:$0xff]
    %v1774 = vld [vmem:[#allocation8 + $0x278] sm:$0xff]
    %v1775 = vld [vmem:[#allocation8 + $0x280] sm:$0xff]
    %v1776 = vld [vmem:[#allocation8 + $0x288] sm:$0xff]
    %v1777 = vld [vmem:[#allocation8 + $0x290] sm:$0xff]
    %v1778 = vld [vmem:[#allocation8 + $0x298] sm:$0xff]
    %v1779 = vld [vmem:[#allocation8 + $0x2a0] sm:$0xff]
    %v1780 = vld [vmem:[#allocation8 + $0x2a8] sm:$0xff]
    %v1781 = vld [vmem:[#allocation8 + $0x2b0] sm:$0xff]
    %v1782 = vld [vmem:[#allocation8 + $0x2b8] sm:$0xff]
    %v1783 = vld [vmem:[#allocation8 + $0x2c0] sm:$0xff]
    %v1784 = vld [vmem:[#allocation8 + $0x2c8] sm:$0xff]
    %v1785 = vld [vmem:[#allocation8 + $0x2d0] sm:$0xff]
    %v1786 = vld [vmem:[#allocation8 + $0x2d8] sm:$0xff]
    %v1787 = vld [vmem:[#allocation8 + $0x2e0] sm:$0xff]
    %v1788 = vld [vmem:[#allocation8 + $0x2e8] sm:$0xff]
    %v1789 = vld [vmem:[#allocation8 + $0x2f0] sm:$0xff]
    %v1790 = vld [vmem:[#allocation8 + $0x2f8] sm:$0xff]
    %v1791 = vld [vmem:[#allocation8 + $0x300] sm:$0xff]
    %v1792 = vld [vmem:[#allocation8 + $0x308] sm:$0xff]
    %v1793 = vld [vmem:[#allocation8 + $0x310] sm:$0xff]
    %v1794 = vld [vmem:[#allocation8 + $0x318] sm:$0xff]
    %v1795 = vld [vmem:[#allocation8 + $0x320] sm:$0xff]
    %v1796 = vld [vmem:[#allocation8 + $0x328] sm:$0xff]
    %v1797 = vld [vmem:[#allocation8 + $0x330] sm:$0xff]
    %v1798 = vld [vmem:[#allocation8 + $0x338] sm:$0xff]
    %v1799 = vld [vmem:[#allocation8 + $0x340] sm:$0xff]
    %v1800 = vld [vmem:[#allocation8 + $0x348] sm:$0xff]
    %v1801 = vld [vmem:[#allocation8 + $0x350] sm:$0xff]
    %v1802 = vld [vmem:[#allocation8 + $0x358] sm:$0xff]
    %v1803 = vld [vmem:[#allocation8 + $0x360] sm:$0xff]
    %v1804 = vld [vmem:[#allocation8 + $0x368] sm:$0xff]
    %v1805 = vld [vmem:[#allocation8 + $0x370] sm:$0xff]
    %v1806 = vld [vmem:[#allocation8 + $0x378] sm:$0xff]
    %v1807 = vld [vmem:[#allocation8 + $0x380] sm:$0xff]
    %v1808 = vld [vmem:[#allocation8 + $0x388] sm:$0xff]
    %v1809 = vld [vmem:[#allocation8 + $0x390] sm:$0xff]
    %v1810 = vld [vmem:[#allocation8 + $0x398] sm:$0xff]
    %v1811 = vld [vmem:[#allocation8 + $0x3a0] sm:$0xff]
    %v1812 = vld [vmem:[#allocation8 + $0x3a8] sm:$0xff]
    %v1813 = vld [vmem:[#allocation8 + $0x3b0] sm:$0xff]
    %v1814 = vld [vmem:[#allocation8 + $0x3b8] sm:$0xff]
    %v1815 = vld [vmem:[#allocation8 + $0x3c0] sm:$0xff]
    %v1816 = vld [vmem:[#allocation8 + $0x3c8] sm:$0xff]
    %v1817 = vld [vmem:[#allocation8 + $0x3d0] sm:$0xff]
    %v1818 = vld [vmem:[#allocation8 + $0x3d8] sm:$0xff]
    %v1819 = vld [vmem:[#allocation8 + $0x3e0] sm:$0xff]
    %v1820 = vld [vmem:[#allocation8 + $0x3e8] sm:$0xff]
    %v1821 = vld [vmem:[#allocation8 + $0x3f0] sm:$0xff]
    %v1822 = vld [vmem:[#allocation8 + $0x3f8] sm:$0xff]
    %v1823 = vld [vmem:[%s4] sm:$0xf]
    %v1825 = vlaneseq
    %v1826 = vshrl.u32 %v1825, 7
    %v1827 = vsub.s32 0, %v1826
    %v1828 = vrot.slane %v1823, %v1827
    %v1829 = vlaneseq
    %v1830 = vshrl.u32 %v1829, 7
    %v1831 = vsub.s32 1, %v1830
    %v1832 = vrot.slane %v1823, %v1831
    %v1833 = vlaneseq
    %v1834 = vshrl.u32 %v1833, 7
    %v1835 = vsub.s32 2, %v1834
    %v1836 = vrot.slane %v1823, %v1835
    %v1837 = vlaneseq
    %v1838 = vshrl.u32 %v1837, 7
    %v1839 = vsub.s32 3, %v1838
    %v1840 = vrot.slane %v1823, %v1839
    %v1973 = vunpack.c.l.b16 %v1695
    %v1974 = vunpack.c.h.b16 %v1695
    %v1975 = vunpack.c.l.b16 %v1696
    %v1976 = vunpack.c.h.b16 %v1696
    %v1977 = vunpack.c.l.b16 %v1697
    %v1978 = vunpack.c.h.b16 %v1697
    %v1979 = vunpack.c.l.b16 %v1698
    %v1980 = vunpack.c.h.b16 %v1698
    %v1981 = vunpack.c.l.b16 %v1699
    %v1982 = vunpack.c.h.b16 %v1699
    %v1983 = vunpack.c.l.b16 %v1700
    %v1984 = vunpack.c.h.b16 %v1700
    %v1985 = vunpack.c.l.b16 %v1701
    %v1986 = vunpack.c.h.b16 %v1701
    %v1987 = vunpack.c.l.b16 %v1702
    %v1988 = vunpack.c.h.b16 %v1702
    %v1989 = vunpack.c.l.b16 %v1703
    %v1990 = vunpack.c.h.b16 %v1703
    %v1991 = vunpack.c.l.b16 %v1704
    %v1992 = vunpack.c.h.b16 %v1704
    %v1993 = vunpack.c.l.b16 %v1705
    %v1994 = vunpack.c.h.b16 %v1705
    %v1995 = vunpack.c.l.b16 %v1706
    %v1996 = vunpack.c.h.b16 %v1706
    %v1997 = vunpack.c.l.b16 %v1707
    %v1998 = vunpack.c.h.b16 %v1707
    %v1999 = vunpack.c.l.b16 %v1708
    %v2000 = vunpack.c.h.b16 %v1708
    %v2001 = vunpack.c.l.b16 %v1709
    %v2002 = vunpack.c.h.b16 %v1709
    %v2003 = vunpack.c.l.b16 %v1710
    %v2004 = vunpack.c.h.b16 %v1710
    %v2005 = vunpack.c.l.b16 %v1711
    %v2006 = vunpack.c.h.b16 %v1711
    %v2007 = vunpack.c.l.b16 %v1712
    %v2008 = vunpack.c.h.b16 %v1712
    %v2009 = vunpack.c.l.b16 %v1713
    %v2010 = vunpack.c.h.b16 %v1713
    %v2011 = vunpack.c.l.b16 %v1714
    %v2012 = vunpack.c.h.b16 %v1714
    %v2013 = vunpack.c.l.b16 %v1715
    %v2014 = vunpack.c.h.b16 %v1715
    %v2015 = vunpack.c.l.b16 %v1716
    %v2016 = vunpack.c.h.b16 %v1716
    %v2017 = vunpack.c.l.b16 %v1717
    %v2018 = vunpack.c.h.b16 %v1717
    %v2019 = vunpack.c.l.b16 %v1718
    %v2020 = vunpack.c.h.b16 %v1718
    %v2021 = vunpack.c.l.b16 %v1719
    %v2022 = vunpack.c.h.b16 %v1719
    %v2023 = vunpack.c.l.b16 %v1720
    %v2024 = vunpack.c.h.b16 %v1720
    %v2025 = vunpack.c.l.b16 %v1721
    %v2026 = vunpack.c.h.b16 %v1721
    %v2027 = vunpack.c.l.b16 %v1722
    %v2028 = vunpack.c.h.b16 %v1722
    %v2029 = vunpack.c.l.b16 %v1723
    %v2030 = vunpack.c.h.b16 %v1723
    %v2031 = vunpack.c.l.b16 %v1724
    %v2032 = vunpack.c.h.b16 %v1724
    %v2033 = vunpack.c.l.b16 %v1725
    %v2034 = vunpack.c.h.b16 %v1725
    %v2035 = vunpack.c.l.b16 %v1726
    %v2036 = vunpack.c.h.b16 %v1726
    %v2037 = vunpack.c.l.b16 %v1727
    %v2038 = vunpack.c.h.b16 %v1727
    %v2039 = vunpack.c.l.b16 %v1728
    %v2040 = vunpack.c.h.b16 %v1728
    %v2041 = vunpack.c.l.b16 %v1729
    %v2042 = vunpack.c.h.b16 %v1729
    %v2043 = vunpack.c.l.b16 %v1730
    %v2044 = vunpack.c.h.b16 %v1730
    %v2045 = vunpack.c.l.b16 %v1731
    %v2046 = vunpack.c.h.b16 %v1731
    %v2047 = vunpack.c.l.b16 %v1732
    %v2048 = vunpack.c.h.b16 %v1732
    %v2049 = vunpack.c.l.b16 %v1733
    %v2050 = vunpack.c.h.b16 %v1733
    %v2051 = vunpack.c.l.b16 %v1734
    %v2052 = vunpack.c.h.b16 %v1734
    %v2053 = vunpack.c.l.b16 %v1735
    %v2054 = vunpack.c.h.b16 %v1735
    %v2055 = vunpack.c.l.b16 %v1736
    %v2056 = vunpack.c.h.b16 %v1736
    %v2057 = vunpack.c.l.b16 %v1737
    %v2058 = vunpack.c.h.b16 %v1737
    %v2059 = vunpack.c.l.b16 %v1738
    %v2060 = vunpack.c.h.b16 %v1738
    %v2061 = vunpack.c.l.b16 %v1739
    %v2062 = vunpack.c.h.b16 %v1739
    %v2063 = vunpack.c.l.b16 %v1740
    %v2064 = vunpack.c.h.b16 %v1740
    %v2065 = vunpack.c.l.b16 %v1741
    %v2066 = vunpack.c.h.b16 %v1741
    %v2067 = vunpack.c.l.b16 %v1742
    %v2068 = vunpack.c.h.b16 %v1742
    %v2069 = vunpack.c.l.b16 %v1743
    %v2070 = vunpack.c.h.b16 %v1743
    %v2071 = vunpack.c.l.b16 %v1744
    %v2072 = vunpack.c.h.b16 %v1744
    %v2073 = vunpack.c.l.b16 %v1745
    %v2074 = vunpack.c.h.b16 %v1745
    %v2075 = vunpack.c.l.b16 %v1746
    %v2076 = vunpack.c.h.b16 %v1746
    %v2077 = vunpack.c.l.b16 %v1747
    %v2078 = vunpack.c.h.b16 %v1747
    %v2079 = vunpack.c.l.b16 %v1748
    %v2080 = vunpack.c.h.b16 %v1748
    %v2081 = vunpack.c.l.b16 %v1749
    %v2082 = vunpack.c.h.b16 %v1749
    %v2083 = vunpack.c.l.b16 %v1750
    %v2084 = vunpack.c.h.b16 %v1750
    %v2085 = vunpack.c.l.b16 %v1751
    %v2086 = vunpack.c.h.b16 %v1751
    %v2087 = vunpack.c.l.b16 %v1752
    %v2088 = vunpack.c.h.b16 %v1752
    %v2089 = vunpack.c.l.b16 %v1753
    %v2090 = vunpack.c.h.b16 %v1753
    %v2091 = vunpack.c.l.b16 %v1754
    %v2092 = vunpack.c.h.b16 %v1754
    %v2093 = vunpack.c.l.b16 %v1755
    %v2094 = vunpack.c.h.b16 %v1755
    %v2095 = vunpack.c.l.b16 %v1756
    %v2096 = vunpack.c.h.b16 %v1756
    %v2097 = vunpack.c.l.b16 %v1757
    %v2098 = vunpack.c.h.b16 %v1757
    %v2099 = vunpack.c.l.b16 %v1758
    %v2100 = vunpack.c.h.b16 %v1758
    %v2101 = vunpack.c.l.b16 %v1759
    %v2102 = vunpack.c.h.b16 %v1759
    %v2103 = vunpack.c.l.b16 %v1760
    %v2104 = vunpack.c.h.b16 %v1760
    %v2105 = vunpack.c.l.b16 %v1761
    %v2106 = vunpack.c.h.b16 %v1761
    %v2107 = vunpack.c.l.b16 %v1762
    %v2108 = vunpack.c.h.b16 %v1762
    %v2109 = vunpack.c.l.b16 %v1763
    %v2110 = vunpack.c.h.b16 %v1763
    %v2111 = vunpack.c.l.b16 %v1764
    %v2112 = vunpack.c.h.b16 %v1764
    %v2113 = vunpack.c.l.b16 %v1765
    %v2114 = vunpack.c.h.b16 %v1765
    %v2115 = vunpack.c.l.b16 %v1766
    %v2116 = vunpack.c.h.b16 %v1766
    %v2117 = vunpack.c.l.b16 %v1767
    %v2118 = vunpack.c.h.b16 %v1767
    %v2119 = vunpack.c.l.b16 %v1768
    %v2120 = vunpack.c.h.b16 %v1768
    %v2121 = vunpack.c.l.b16 %v1769
    %v2122 = vunpack.c.h.b16 %v1769
    %v2123 = vunpack.c.l.b16 %v1770
    %v2124 = vunpack.c.h.b16 %v1770
    %v2125 = vunpack.c.l.b16 %v1771
    %v2126 = vunpack.c.h.b16 %v1771
    %v2127 = vunpack.c.l.b16 %v1772
    %v2128 = vunpack.c.h.b16 %v1772
    %v2129 = vunpack.c.l.b16 %v1773
    %v2130 = vunpack.c.h.b16 %v1773
    %v2131 = vunpack.c.l.b16 %v1774
    %v2132 = vunpack.c.h.b16 %v1774
    %v2133 = vunpack.c.l.b16 %v1775
    %v2134 = vunpack.c.h.b16 %v1775
    %v2135 = vunpack.c.l.b16 %v1776
    %v2136 = vunpack.c.h.b16 %v1776
    %v2137 = vunpack.c.l.b16 %v1777
    %v2138 = vunpack.c.h.b16 %v1777
    %v2139 = vunpack.c.l.b16 %v1778
    %v2140 = vunpack.c.h.b16 %v1778
    %v2141 = vunpack.c.l.b16 %v1779
    %v2142 = vunpack.c.h.b16 %v1779
    %v2143 = vunpack.c.l.b16 %v1780
    %v2144 = vunpack.c.h.b16 %v1780
    %v2145 = vunpack.c.l.b16 %v1781
    %v2146 = vunpack.c.h.b16 %v1781
    %v2147 = vunpack.c.l.b16 %v1782
    %v2148 = vunpack.c.h.b16 %v1782
    %v2149 = vunpack.c.l.b16 %v1783
    %v2150 = vunpack.c.h.b16 %v1783
    %v2151 = vunpack.c.l.b16 %v1784
    %v2152 = vunpack.c.h.b16 %v1784
    %v2153 = vunpack.c.l.b16 %v1785
    %v2154 = vunpack.c.h.b16 %v1785
    %v2155 = vunpack.c.l.b16 %v1786
    %v2156 = vunpack.c.h.b16 %v1786
    %v2157 = vunpack.c.l.b16 %v1787
    %v2158 = vunpack.c.h.b16 %v1787
    %v2159 = vunpack.c.l.b16 %v1788
    %v2160 = vunpack.c.h.b16 %v1788
    %v2161 = vunpack.c.l.b16 %v1789
    %v2162 = vunpack.c.h.b16 %v1789
    %v2163 = vunpack.c.l.b16 %v1790
    %v2164 = vunpack.c.h.b16 %v1790
    %v2165 = vunpack.c.l.b16 %v1791
    %v2166 = vunpack.c.h.b16 %v1791
    %v2167 = vunpack.c.l.b16 %v1792
    %v2168 = vunpack.c.h.b16 %v1792
    %v2169 = vunpack.c.l.b16 %v1793
    %v2170 = vunpack.c.h.b16 %v1793
    %v2171 = vunpack.c.l.b16 %v1794
    %v2172 = vunpack.c.h.b16 %v1794
    %v2173 = vunpack.c.l.b16 %v1795
    %v2174 = vunpack.c.h.b16 %v1795
    %v2175 = vunpack.c.l.b16 %v1796
    %v2176 = vunpack.c.h.b16 %v1796
    %v2177 = vunpack.c.l.b16 %v1797
    %v2178 = vunpack.c.h.b16 %v1797
    %v2179 = vunpack.c.l.b16 %v1798
    %v2180 = vunpack.c.h.b16 %v1798
    %v2181 = vunpack.c.l.b16 %v1799
    %v2182 = vunpack.c.h.b16 %v1799
    %v2183 = vunpack.c.l.b16 %v1800
    %v2184 = vunpack.c.h.b16 %v1800
    %v2185 = vunpack.c.l.b16 %v1801
    %v2186 = vunpack.c.h.b16 %v1801
    %v2187 = vunpack.c.l.b16 %v1802
    %v2188 = vunpack.c.h.b16 %v1802
    %v2189 = vunpack.c.l.b16 %v1803
    %v2190 = vunpack.c.h.b16 %v1803
    %v2191 = vunpack.c.l.b16 %v1804
    %v2192 = vunpack.c.h.b16 %v1804
    %v2193 = vunpack.c.l.b16 %v1805
    %v2194 = vunpack.c.h.b16 %v1805
    %v2195 = vunpack.c.l.b16 %v1806
    %v2196 = vunpack.c.h.b16 %v1806
    %v2197 = vunpack.c.l.b16 %v1807
    %v2198 = vunpack.c.h.b16 %v1807
    %v2199 = vunpack.c.l.b16 %v1808
    %v2200 = vunpack.c.h.b16 %v1808
    %v2201 = vunpack.c.l.b16 %v1809
    %v2202 = vunpack.c.h.b16 %v1809
    %v2203 = vunpack.c.l.b16 %v1810
    %v2204 = vunpack.c.h.b16 %v1810
    %v2205 = vunpack.c.l.b16 %v1811
    %v2206 = vunpack.c.h.b16 %v1811
    %v2207 = vunpack.c.l.b16 %v1812
    %v2208 = vunpack.c.h.b16 %v1812
    %v2209 = vunpack.c.l.b16 %v1813
    %v2210 = vunpack.c.h.b16 %v1813
    %v2211 = vunpack.c.l.b16 %v1814
    %v2212 = vunpack.c.h.b16 %v1814
    %v2213 = vunpack.c.l.b16 %v1815
    %v2214 = vunpack.c.h.b16 %v1815
    %v2215 = vunpack.c.l.b16 %v1816
    %v2216 = vunpack.c.h.b16 %v1816
    %v2217 = vunpack.c.l.b16 %v1817
    %v2218 = vunpack.c.h.b16 %v1817
    %v2219 = vunpack.c.l.b16 %v1818
    %v2220 = vunpack.c.h.b16 %v1818
    %v2221 = vunpack.c.l.b16 %v1819
    %v2222 = vunpack.c.h.b16 %v1819
    %v2223 = vunpack.c.l.b16 %v1820
    %v2224 = vunpack.c.h.b16 %v1820
    %v2225 = vunpack.c.l.b16 %v1821
    %v2226 = vunpack.c.h.b16 %v1821
    %v2227 = vunpack.c.l.b16 %v1822
    %v2228 = vunpack.c.h.b16 %v1822
    %v2229 = vpack.c.b16 %v1977, %v1973
    %v2230 = vpack.c.b16 %v1978, %v1974
    %v2231 = vpack.c.b16 %v1979, %v1975
    %v2232 = vpack.c.b16 %v1980, %v1976
    %v2233 = vpack.c.b16 %v1985, %v1981
    %v2234 = vpack.c.b16 %v1986, %v1982
    %v2235 = vpack.c.b16 %v1987, %v1983
    %v2236 = vpack.c.b16 %v1988, %v1984
    %v2237 = vpack.c.b16 %v1993, %v1989
    %v2238 = vpack.c.b16 %v1994, %v1990
    %v2239 = vpack.c.b16 %v1995, %v1991
    %v2240 = vpack.c.b16 %v1996, %v1992
    %v2241 = vpack.c.b16 %v2001, %v1997
    %v2242 = vpack.c.b16 %v2002, %v1998
    %v2243 = vpack.c.b16 %v2003, %v1999
    %v2244 = vpack.c.b16 %v2004, %v2000
    %v2245 = vpack.c.b16 %v2009, %v2005
    %v2246 = vpack.c.b16 %v2010, %v2006
    %v2247 = vpack.c.b16 %v2011, %v2007
    %v2248 = vpack.c.b16 %v2012, %v2008
    %v2249 = vpack.c.b16 %v2017, %v2013
    %v2250 = vpack.c.b16 %v2018, %v2014
    %v2251 = vpack.c.b16 %v2019, %v2015
    %v2252 = vpack.c.b16 %v2020, %v2016
    %v2253 = vpack.c.b16 %v2025, %v2021
    %v2254 = vpack.c.b16 %v2026, %v2022
    %v2255 = vpack.c.b16 %v2027, %v2023
    %v2256 = vpack.c.b16 %v2028, %v2024
    %v2257 = vpack.c.b16 %v2033, %v2029
    %v2258 = vpack.c.b16 %v2034, %v2030
    %v2259 = vpack.c.b16 %v2035, %v2031
    %v2260 = vpack.c.b16 %v2036, %v2032
    %v2261 = vpack.c.b16 %v2041, %v2037
    %v2262 = vpack.c.b16 %v2042, %v2038
    %v2263 = vpack.c.b16 %v2043, %v2039
    %v2264 = vpack.c.b16 %v2044, %v2040
    %v2265 = vpack.c.b16 %v2049, %v2045
    %v2266 = vpack.c.b16 %v2050, %v2046
    %v2267 = vpack.c.b16 %v2051, %v2047
    %v2268 = vpack.c.b16 %v2052, %v2048
    %v2269 = vpack.c.b16 %v2057, %v2053
    %v2270 = vpack.c.b16 %v2058, %v2054
    %v2271 = vpack.c.b16 %v2059, %v2055
    %v2272 = vpack.c.b16 %v2060, %v2056
    %v2273 = vpack.c.b16 %v2065, %v2061
    %v2274 = vpack.c.b16 %v2066, %v2062
    %v2275 = vpack.c.b16 %v2067, %v2063
    %v2276 = vpack.c.b16 %v2068, %v2064
    %v2277 = vpack.c.b16 %v2073, %v2069
    %v2278 = vpack.c.b16 %v2074, %v2070
    %v2279 = vpack.c.b16 %v2075, %v2071
    %v2280 = vpack.c.b16 %v2076, %v2072
    %v2281 = vpack.c.b16 %v2081, %v2077
    %v2282 = vpack.c.b16 %v2082, %v2078
    %v2283 = vpack.c.b16 %v2083, %v2079
    %v2284 = vpack.c.b16 %v2084, %v2080
    %v2285 = vpack.c.b16 %v2089, %v2085
    %v2286 = vpack.c.b16 %v2090, %v2086
    %v2287 = vpack.c.b16 %v2091, %v2087
    %v2288 = vpack.c.b16 %v2092, %v2088
    %v2289 = vpack.c.b16 %v2097, %v2093
    %v2290 = vpack.c.b16 %v2098, %v2094
    %v2291 = vpack.c.b16 %v2099, %v2095
    %v2292 = vpack.c.b16 %v2100, %v2096
    %v2293 = vpack.c.b16 %v2105, %v2101
    %v2294 = vpack.c.b16 %v2106, %v2102
    %v2295 = vpack.c.b16 %v2107, %v2103
    %v2296 = vpack.c.b16 %v2108, %v2104
    %v2297 = vpack.c.b16 %v2113, %v2109
    %v2298 = vpack.c.b16 %v2114, %v2110
    %v2299 = vpack.c.b16 %v2115, %v2111
    %v2300 = vpack.c.b16 %v2116, %v2112
    %v2301 = vpack.c.b16 %v2121, %v2117
    %v2302 = vpack.c.b16 %v2122, %v2118
    %v2303 = vpack.c.b16 %v2123, %v2119
    %v2304 = vpack.c.b16 %v2124, %v2120
    %v2305 = vpack.c.b16 %v2129, %v2125
    %v2306 = vpack.c.b16 %v2130, %v2126
    %v2307 = vpack.c.b16 %v2131, %v2127
    %v2308 = vpack.c.b16 %v2132, %v2128
    %v2309 = vpack.c.b16 %v2137, %v2133
    %v2310 = vpack.c.b16 %v2138, %v2134
    %v2311 = vpack.c.b16 %v2139, %v2135
    %v2312 = vpack.c.b16 %v2140, %v2136
    %v2313 = vpack.c.b16 %v2145, %v2141
    %v2314 = vpack.c.b16 %v2146, %v2142
    %v2315 = vpack.c.b16 %v2147, %v2143
    %v2316 = vpack.c.b16 %v2148, %v2144
    %v2317 = vpack.c.b16 %v2153, %v2149
    %v2318 = vpack.c.b16 %v2154, %v2150
    %v2319 = vpack.c.b16 %v2155, %v2151
    %v2320 = vpack.c.b16 %v2156, %v2152
    %v2321 = vpack.c.b16 %v2161, %v2157
    %v2322 = vpack.c.b16 %v2162, %v2158
    %v2323 = vpack.c.b16 %v2163, %v2159
    %v2324 = vpack.c.b16 %v2164, %v2160
    %v2325 = vpack.c.b16 %v2169, %v2165
    %v2326 = vpack.c.b16 %v2170, %v2166
    %v2327 = vpack.c.b16 %v2171, %v2167
    %v2328 = vpack.c.b16 %v2172, %v2168
    %v2329 = vpack.c.b16 %v2177, %v2173
    %v2330 = vpack.c.b16 %v2178, %v2174
    %v2331 = vpack.c.b16 %v2179, %v2175
    %v2332 = vpack.c.b16 %v2180, %v2176
    %v2333 = vpack.c.b16 %v2185, %v2181
    %v2334 = vpack.c.b16 %v2186, %v2182
    %v2335 = vpack.c.b16 %v2187, %v2183
    %v2336 = vpack.c.b16 %v2188, %v2184
    %v2337 = vpack.c.b16 %v2193, %v2189
    %v2338 = vpack.c.b16 %v2194, %v2190
    %v2339 = vpack.c.b16 %v2195, %v2191
    %v2340 = vpack.c.b16 %v2196, %v2192
    %v2341 = vpack.c.b16 %v2201, %v2197
    %v2342 = vpack.c.b16 %v2202, %v2198
    %v2343 = vpack.c.b16 %v2203, %v2199
    %v2344 = vpack.c.b16 %v2204, %v2200
    %v2345 = vpack.c.b16 %v2209, %v2205
    %v2346 = vpack.c.b16 %v2210, %v2206
    %v2347 = vpack.c.b16 %v2211, %v2207
    %v2348 = vpack.c.b16 %v2212, %v2208
    %v2349 = vpack.c.b16 %v2217, %v2213
    %v2350 = vpack.c.b16 %v2218, %v2214
    %v2351 = vpack.c.b16 %v2219, %v2215
    %v2352 = vpack.c.b16 %v2220, %v2216
    %v2353 = vpack.c.b16 %v2225, %v2221
    %v2354 = vpack.c.b16 %v2226, %v2222
    %v2355 = vpack.c.b16 %v2227, %v2223
    %v2356 = vpack.c.b16 %v2228, %v2224
    %2485 = vmatprep.subr.bf16.mxu0 %v2258
    %2486 = vmatpush1.bf16.msra.mxu0 %v2257
    %2487 = vmatprep.subr.bf16.mxu0 %v2254
    %2488 = vmatpush1.bf16.msra.mxu0 %v2253
    %2489 = vmatprep.subr.bf16.mxu0 %v2250
    %2490 = vmatpush1.bf16.msra.mxu0 %v2249
    %2491 = vmatprep.subr.bf16.mxu0 %v2246
    %2492 = vmatpush1.bf16.msra.mxu0 %v2245
    %2493 = vmatprep.subr.bf16.mxu0 %v2242
    %2494 = vmatpush1.bf16.msra.mxu0 %v2241
    %2495 = vmatprep.subr.bf16.mxu0 %v2238
    %2496 = vmatpush1.bf16.msra.mxu0 %v2237
    %2497 = vmatprep.subr.bf16.mxu0 %v2234
    %2498 = vmatpush1.bf16.msra.mxu0 %v2233
    %2499 = vmatprep.subr.bf16.mxu0 %v2230
    %2500 = vmatpush1.bf16.msra.mxu0 %v2229
    %2501 = vmatprep.subr.bf16.mxu0 %v2290
    %2502 = vmatpush2.bf16.msra.mxu0 %v2289
    %2503 = vmatprep.subr.bf16.mxu0 %v2286
    %2504 = vmatpush2.bf16.msra.mxu0 %v2285
    %2505 = vmatprep.subr.bf16.mxu0 %v2282
    %2506 = vmatpush2.bf16.msra.mxu0 %v2281
    %2507 = vmatprep.subr.bf16.mxu0 %v2278
    %2508 = vmatpush2.bf16.msra.mxu0 %v2277
    %2509 = vmatprep.subr.bf16.mxu0 %v2274
    %2510 = vmatpush2.bf16.msra.mxu0 %v2273
    %2511 = vmatprep.subr.bf16.mxu0 %v2270
    %2512 = vmatpush2.bf16.msra.mxu0 %v2269
    %2513 = vmatprep.subr.bf16.mxu0 %v2266
    %2514 = vmatpush2.bf16.msra.mxu0 %v2265
    %2515 = vmatprep.subr.bf16.mxu0 %v2262
    %2516 = vmatpush2.bf16.msra.mxu0 %v2261
    %2517 = vmatprep.mubr.bf16.mxu0 %v1692
    %2518 = vmatmul.mubr.bf16.gmra.mxu0 %v1691
    %v2519 = vpop.f32.mrf.mxu0
    %v2520 = vadd.f32 %v1828, %v2519
    %v2521 = vpop.f32.mrf.mxu0
    %v2522 = vadd.f32 %v1832, %v2521
    %v2523 = vpop.f32.mrf.mxu0
    %v2524 = vadd.f32 %v1828, %v2523
    %v2525 = vpop.f32.mrf.mxu0
    %v2526 = vadd.f32 %v1832, %v2525
    %2527 = vdwg.mxu0
    %2528 = vmatprep.subr.bf16.mxu0 %v2322
    %2529 = vmatpush1.bf16.msra.mxu0 %v2321
    %2530 = vmatprep.subr.bf16.mxu0 %v2318
    %2531 = vmatpush1.bf16.msra.mxu0 %v2317
    %2532 = vmatprep.subr.bf16.mxu0 %v2314
    %2533 = vmatpush1.bf16.msra.mxu0 %v2313
    %2534 = vmatprep.subr.bf16.mxu0 %v2310
    %2535 = vmatpush1.bf16.msra.mxu0 %v2309
    %2536 = vmatprep.subr.bf16.mxu0 %v2306
    %2537 = vmatpush1.bf16.msra.mxu0 %v2305
    %2538 = vmatprep.subr.bf16.mxu0 %v2302
    %2539 = vmatpush1.bf16.msra.mxu0 %v2301
    %2540 = vmatprep.subr.bf16.mxu0 %v2298
    %2541 = vmatpush1.bf16.msra.mxu0 %v2297
    %2542 = vmatprep.subr.bf16.mxu0 %v2294
    %2543 = vmatpush1.bf16.msra.mxu0 %v2293
    %2544 = vmatprep.subr.bf16.mxu0 %v2354
    %2545 = vmatpush2.bf16.msra.mxu0 %v2353
    %2546 = vmatprep.subr.bf16.mxu0 %v2350
    %2547 = vmatpush2.bf16.msra.mxu0 %v2349
    %2548 = vmatprep.subr.bf16.mxu0 %v2346
    %2549 = vmatpush2.bf16.msra.mxu0 %v2345
    %2550 = vmatprep.subr.bf16.mxu0 %v2342
    %2551 = vmatpush2.bf16.msra.mxu0 %v2341
    %2552 = vmatprep.subr.bf16.mxu0 %v2338
    %2553 = vmatpush2.bf16.msra.mxu0 %v2337
    %2554 = vmatprep.subr.bf16.mxu0 %v2334
    %2555 = vmatpush2.bf16.msra.mxu0 %v2333
    %2556 = vmatprep.subr.bf16.mxu0 %v2330
    %2557 = vmatpush2.bf16.msra.mxu0 %v2329
    %2558 = vmatprep.subr.bf16.mxu0 %v2326
    %2559 = vmatpush2.bf16.msra.mxu0 %v2325
    %2560 = vmatprep.mubr.bf16.mxu0 %v1694
    %2561 = vmatmul.mubr.bf16.gmra.mxu0 %v1693
    %v2562 = vpop.f32.mrf.mxu0
    %v2563 = vadd.f32 %v2520, %v2562
    %v2564 = vpop.f32.mrf.mxu0
    %v2565 = vadd.f32 %v2522, %v2564
    %v2566 = vpop.f32.mrf.mxu0
    %v2567 = vadd.f32 %v2524, %v2566
    %v2568 = vpop.f32.mrf.mxu0
    %v2569 = vadd.f32 %v2526, %v2568
    %2570 = vdwg.mxu0
    %2571 = vmatprep.subr.bf16.mxu0 %v2260
    %2572 = vmatpush1.bf16.msra.mxu0 %v2259
    %2573 = vmatprep.subr.bf16.mxu0 %v2256
    %2574 = vmatpush1.bf16.msra.mxu0 %v2255
    %2575 = vmatprep.subr.bf16.mxu0 %v2252
    %2576 = vmatpush1.bf16.msra.mxu0 %v2251
    %2577 = vmatprep.subr.bf16.mxu0 %v2248
    %2578 = vmatpush1.bf16.msra.mxu0 %v2247
    %2579 = vmatprep.subr.bf16.mxu0 %v2244
    %2580 = vmatpush1.bf16.msra.mxu0 %v2243
    %2581 = vmatprep.subr.bf16.mxu0 %v2240
    %2582 = vmatpush1.bf16.msra.mxu0 %v2239
    %2583 = vmatprep.subr.bf16.mxu0 %v2236
    %2584 = vmatpush1.bf16.msra.mxu0 %v2235
    %2585 = vmatprep.subr.bf16.mxu0 %v2232
    %2586 = vmatpush1.bf16.msra.mxu0 %v2231
    %2587 = vmatprep.subr.bf16.mxu0 %v2292
    %2588 = vmatpush2.bf16.msra.mxu0 %v2291
    %2589 = vmatprep.subr.bf16.mxu0 %v2288
    %2590 = vmatpush2.bf16.msra.mxu0 %v2287
    %2591 = vmatprep.subr.bf16.mxu0 %v2284
    %2592 = vmatpush2.bf16.msra.mxu0 %v2283
    %2593 = vmatprep.subr.bf16.mxu0 %v2280
    %2594 = vmatpush2.bf16.msra.mxu0 %v2279
    %2595 = vmatprep.subr.bf16.mxu0 %v2276
    %2596 = vmatpush2.bf16.msra.mxu0 %v2275
    %2597 = vmatprep.subr.bf16.mxu0 %v2272
    %2598 = vmatpush2.bf16.msra.mxu0 %v2271
    %2599 = vmatprep.subr.bf16.mxu0 %v2268
    %2600 = vmatpush2.bf16.msra.mxu0 %v2267
    %2601 = vmatprep.subr.bf16.mxu0 %v2264
    %2602 = vmatpush2.bf16.msra.mxu0 %v2263
    %2603 = vmatprep.mubr.bf16.mxu0 %v1692
    %2604 = vmatmul.mubr.bf16.gmra.mxu0 %v1691
    %v2605 = vpop.f32.mrf.mxu0
    %v2606 = vadd.f32 %v1836, %v2605
    %v2607 = vpop.f32.mrf.mxu0
    %v2608 = vadd.f32 %v1840, %v2607
    %v2609 = vpop.f32.mrf.mxu0
    %v2610 = vadd.f32 %v1836, %v2609
    %v2611 = vpop.f32.mrf.mxu0
    %v2612 = vadd.f32 %v1840, %v2611
    %2613 = vdwg.mxu0
    %2614 = vmatprep.subr.bf16.mxu0 %v2324
    %2615 = vmatpush1.bf16.msra.mxu0 %v2323
    %2616 = vmatprep.subr.bf16.mxu0 %v2320
    %2617 = vmatpush1.bf16.msra.mxu0 %v2319
    %2618 = vmatprep.subr.bf16.mxu0 %v2316
    %2619 = vmatpush1.bf16.msra.mxu0 %v2315
    %2620 = vmatprep.subr.bf16.mxu0 %v2312
    %2621 = vmatpush1.bf16.msra.mxu0 %v2311
    %2622 = vmatprep.subr.bf16.mxu0 %v2308
    %2623 = vmatpush1.bf16.msra.mxu0 %v2307
    %2624 = vmatprep.subr.bf16.mxu0 %v2304
    %2625 = vmatpush1.bf16.msra.mxu0 %v2303
    %2626 = vmatprep.subr.bf16.mxu0 %v2300
    %2627 = vmatpush1.bf16.msra.mxu0 %v2299
    %2628 = vmatprep.subr.bf16.mxu0 %v2296
    %2629 = vmatpush1.bf16.msra.mxu0 %v2295
    %2630 = vmatprep.subr.bf16.mxu0 %v2356
    %2631 = vmatpush2.bf16.msra.mxu0 %v2355
    %2632 = vmatprep.subr.bf16.mxu0 %v2352
    %2633 = vmatpush2.bf16.msra.mxu0 %v2351
    %2634 = vmatprep.subr.bf16.mxu0 %v2348
    %2635 = vmatpush2.bf16.msra.mxu0 %v2347
    %2636 = vmatprep.subr.bf16.mxu0 %v2344
    %2637 = vmatpush2.bf16.msra.mxu0 %v2343
    %2638 = vmatprep.subr.bf16.mxu0 %v2340
    %2639 = vmatpush2.bf16.msra.mxu0 %v2339
    %2640 = vmatprep.subr.bf16.mxu0 %v2336
    %2641 = vmatpush2.bf16.msra.mxu0 %v2335
    %2642 = vmatprep.subr.bf16.mxu0 %v2332
    %2643 = vmatpush2.bf16.msra.mxu0 %v2331
    %2644 = vmatprep.subr.bf16.mxu0 %v2328
    %2645 = vmatpush2.bf16.msra.mxu0 %v2327
    %2646 = vmatprep.mubr.bf16.mxu0 %v1694
    %2647 = vmatmul.mubr.bf16.gmra.mxu0 %v1693
    %v2648 = vpop.f32.mrf.mxu0
    %v2649 = vadd.f32 %v2606, %v2648
    %v2650 = vpop.f32.mrf.mxu0
    %v2651 = vadd.f32 %v2608, %v2650
    %v2652 = vpop.f32.mrf.mxu0
    %v2653 = vadd.f32 %v2610, %v2652
    %v2654 = vpop.f32.mrf.mxu0
    %v2655 = vadd.f32 %v2612, %v2654
    %2656 = vdwg.mxu0
    %v2657 = vmax.f32 %v2563, 0.0
    %v2658 = vmax.f32 %v2565, 0.0
    %v2659 = vmax.f32 %v2649, 0.0
    %v2660 = vmax.f32 %v2651, 0.0
    %v2661 = vmax.f32 %v2567, 0.0
    %v2662 = vmax.f32 %v2569, 0.0
    %v2663 = vmax.f32 %v2653, 0.0
    %v2664 = vmax.f32 %v2655, 0.0
    %v2665 = vpack.c.bf16 %v2661, %v2657
    %v2666 = vpack.c.bf16 %v2662, %v2658
    %v2667 = vpack.c.bf16 %v2663, %v2659
    %v2668 = vpack.c.bf16 %v2664, %v2660
    %v2669 = vld [vmem:[#allocation10] sm:$0xf]
    %v2670 = vld [vmem:[#allocation10 + $0x4] sm:$0xf]
    %v2671 = vld [vmem:[#allocation10 + $0x8] sm:$0xf]
    %v2672 = vld [vmem:[#allocation10 + $0xc] sm:$0xf]
    %v2673 = vld [vmem:[#allocation10 + $0x10] sm:$0xf]
    %v2674 = vld [vmem:[#allocation10 + $0x14] sm:$0xf]
    %v2675 = vld [vmem:[#allocation10 + $0x18] sm:$0xf]
    %v2676 = vld [vmem:[#allocation10 + $0x1c] sm:$0xf]
    %v2677 = vld [vmem:[#allocation10 + $0x20] sm:$0xf]
    %v2678 = vld [vmem:[#allocation10 + $0x24] sm:$0xf]
    %v2679 = vld [vmem:[#allocation10 + $0x28] sm:$0xf]
    %v2680 = vld [vmem:[#allocation10 + $0x2c] sm:$0xf]
    %v2681 = vld [vmem:[#allocation10 + $0x30] sm:$0xf]
    %v2682 = vld [vmem:[#allocation10 + $0x34] sm:$0xf]
    %v2683 = vld [vmem:[#allocation10 + $0x38] sm:$0xf]
    %v2684 = vld [vmem:[#allocation10 + $0x3c] sm:$0xf]
    %v2685 = vld [vmem:[#allocation10 + $0x40] sm:$0xf]
    %v2686 = vld [vmem:[#allocation10 + $0x44] sm:$0xf]
    %v2687 = vld [vmem:[#allocation10 + $0x48] sm:$0xf]
    %v2688 = vld [vmem:[#allocation10 + $0x4c] sm:$0xf]
    %v2689 = vld [vmem:[#allocation10 + $0x50] sm:$0xf]
    %v2690 = vld [vmem:[#allocation10 + $0x54] sm:$0xf]
    %v2691 = vld [vmem:[#allocation10 + $0x58] sm:$0xf]
    %v2692 = vld [vmem:[#allocation10 + $0x5c] sm:$0xf]
    %v2693 = vld [vmem:[#allocation10 + $0x60] sm:$0xf]
    %v2694 = vld [vmem:[#allocation10 + $0x64] sm:$0xf]
    %v2695 = vld [vmem:[#allocation10 + $0x68] sm:$0xf]
    %v2696 = vld [vmem:[#allocation10 + $0x6c] sm:$0xf]
    %v2697 = vld [vmem:[#allocation10 + $0x70] sm:$0xf]
    %v2698 = vld [vmem:[#allocation10 + $0x74] sm:$0xf]
    %v2699 = vld [vmem:[#allocation10 + $0x78] sm:$0xf]
    %v2700 = vld [vmem:[#allocation10 + $0x7c] sm:$0xf]
    %v2701 = vld [vmem:[#allocation10 + $0x80] sm:$0xf]
    %v2702 = vld [vmem:[#allocation10 + $0x84] sm:$0xf]
    %v2703 = vld [vmem:[#allocation10 + $0x88] sm:$0xf]
    %v2704 = vld [vmem:[#allocation10 + $0x8c] sm:$0xf]
    %v2705 = vld [vmem:[#allocation10 + $0x90] sm:$0xf]
    %v2706 = vld [vmem:[#allocation10 + $0x94] sm:$0xf]
    %v2707 = vld [vmem:[#allocation10 + $0x98] sm:$0xf]
    %v2708 = vld [vmem:[#allocation10 + $0x9c] sm:$0xf]
    %v2709 = vld [vmem:[#allocation10 + $0xa0] sm:$0xf]
    %v2710 = vld [vmem:[#allocation10 + $0xa4] sm:$0xf]
    %v2711 = vld [vmem:[#allocation10 + $0xa8] sm:$0xf]
    %v2712 = vld [vmem:[#allocation10 + $0xac] sm:$0xf]
    %v2713 = vld [vmem:[#allocation10 + $0xb0] sm:$0xf]
    %v2714 = vld [vmem:[#allocation10 + $0xb4] sm:$0xf]
    %v2715 = vld [vmem:[#allocation10 + $0xb8] sm:$0xf]
    %v2716 = vld [vmem:[#allocation10 + $0xbc] sm:$0xf]
    %v2717 = vld [vmem:[#allocation10 + $0xc0] sm:$0xf]
    %v2718 = vld [vmem:[#allocation10 + $0xc4] sm:$0xf]
    %v2719 = vld [vmem:[#allocation10 + $0xc8] sm:$0xf]
    %v2720 = vld [vmem:[#allocation10 + $0xcc] sm:$0xf]
    %v2721 = vld [vmem:[#allocation10 + $0xd0] sm:$0xf]
    %v2722 = vld [vmem:[#allocation10 + $0xd4] sm:$0xf]
    %v2723 = vld [vmem:[#allocation10 + $0xd8] sm:$0xf]
    %v2724 = vld [vmem:[#allocation10 + $0xdc] sm:$0xf]
    %v2725 = vld [vmem:[#allocation10 + $0xe0] sm:$0xf]
    %v2726 = vld [vmem:[#allocation10 + $0xe4] sm:$0xf]
    %v2727 = vld [vmem:[#allocation10 + $0xe8] sm:$0xf]
    %v2728 = vld [vmem:[#allocation10 + $0xec] sm:$0xf]
    %v2729 = vld [vmem:[#allocation10 + $0xf0] sm:$0xf]
    %v2730 = vld [vmem:[#allocation10 + $0xf4] sm:$0xf]
    %v2731 = vld [vmem:[#allocation10 + $0xf8] sm:$0xf]
    %v2732 = vld [vmem:[#allocation10 + $0xfc] sm:$0xf]
    %v2733 = vld [vmem:[%s6] sm:$0x1]
    %v2735 = vlaneseq
    %v2736 = vshrl.u32 %v2735, 7
    %v2737 = vsub.s32 0, %v2736
    %v2738 = vrot.slane %v2733, %v2737
    %v2804 = vunpack.c.l.b16 %v2669
    %v2805 = vunpack.c.l.b16 %v2670
    %v2806 = vunpack.c.l.b16 %v2671
    %v2807 = vunpack.c.l.b16 %v2672
    %v2808 = vunpack.c.l.b16 %v2673
    %v2809 = vunpack.c.l.b16 %v2674
    %v2810 = vunpack.c.l.b16 %v2675
    %v2811 = vunpack.c.l.b16 %v2676
    %v2812 = vunpack.c.l.b16 %v2677
    %v2813 = vunpack.c.l.b16 %v2678
    %v2814 = vunpack.c.l.b16 %v2679
    %v2815 = vunpack.c.l.b16 %v2680
    %v2816 = vunpack.c.l.b16 %v2681
    %v2817 = vunpack.c.l.b16 %v2682
    %v2818 = vunpack.c.l.b16 %v2683
    %v2819 = vunpack.c.l.b16 %v2684
    %v2820 = vunpack.c.l.b16 %v2685
    %v2821 = vunpack.c.l.b16 %v2686
    %v2822 = vunpack.c.l.b16 %v2687
    %v2823 = vunpack.c.l.b16 %v2688
    %v2824 = vunpack.c.l.b16 %v2689
    %v2825 = vunpack.c.l.b16 %v2690
    %v2826 = vunpack.c.l.b16 %v2691
    %v2827 = vunpack.c.l.b16 %v2692
    %v2828 = vunpack.c.l.b16 %v2693
    %v2829 = vunpack.c.l.b16 %v2694
    %v2830 = vunpack.c.l.b16 %v2695
    %v2831 = vunpack.c.l.b16 %v2696
    %v2832 = vunpack.c.l.b16 %v2697
    %v2833 = vunpack.c.l.b16 %v2698
    %v2834 = vunpack.c.l.b16 %v2699
    %v2835 = vunpack.c.l.b16 %v2700
    %v2836 = vunpack.c.l.b16 %v2701
    %v2837 = vunpack.c.l.b16 %v2702
    %v2838 = vunpack.c.l.b16 %v2703
    %v2839 = vunpack.c.l.b16 %v2704
    %v2840 = vunpack.c.l.b16 %v2705
    %v2841 = vunpack.c.l.b16 %v2706
    %v2842 = vunpack.c.l.b16 %v2707
    %v2843 = vunpack.c.l.b16 %v2708
    %v2844 = vunpack.c.l.b16 %v2709
    %v2845 = vunpack.c.l.b16 %v2710
    %v2846 = vunpack.c.l.b16 %v2711
    %v2847 = vunpack.c.l.b16 %v2712
    %v2848 = vunpack.c.l.b16 %v2713
    %v2849 = vunpack.c.l.b16 %v2714
    %v2850 = vunpack.c.l.b16 %v2715
    %v2851 = vunpack.c.l.b16 %v2716
    %v2852 = vunpack.c.l.b16 %v2717
    %v2853 = vunpack.c.l.b16 %v2718
    %v2854 = vunpack.c.l.b16 %v2719
    %v2855 = vunpack.c.l.b16 %v2720
    %v2856 = vunpack.c.l.b16 %v2721
    %v2857 = vunpack.c.l.b16 %v2722
    %v2858 = vunpack.c.l.b16 %v2723
    %v2859 = vunpack.c.l.b16 %v2724
    %v2860 = vunpack.c.l.b16 %v2725
    %v2861 = vunpack.c.l.b16 %v2726
    %v2862 = vunpack.c.l.b16 %v2727
    %v2863 = vunpack.c.l.b16 %v2728
    %v2864 = vunpack.c.l.b16 %v2729
    %v2865 = vunpack.c.l.b16 %v2730
    %v2866 = vunpack.c.l.b16 %v2731
    %v2867 = vunpack.c.l.b16 %v2732
    %v2868 = vpack.c.b16 %v2805, %v2804
    %v2869 = vpack.c.b16 %v2807, %v2806
    %v2870 = vpack.c.b16 %v2809, %v2808
    %v2871 = vpack.c.b16 %v2811, %v2810
    %v2872 = vpack.c.b16 %v2813, %v2812
    %v2873 = vpack.c.b16 %v2815, %v2814
    %v2874 = vpack.c.b16 %v2817, %v2816
    %v2875 = vpack.c.b16 %v2819, %v2818
    %v2876 = vpack.c.b16 %v2821, %v2820
    %v2877 = vpack.c.b16 %v2823, %v2822
    %v2878 = vpack.c.b16 %v2825, %v2824
    %v2879 = vpack.c.b16 %v2827, %v2826
    %v2880 = vpack.c.b16 %v2829, %v2828
    %v2881 = vpack.c.b16 %v2831, %v2830
    %v2882 = vpack.c.b16 %v2833, %v2832
    %v2883 = vpack.c.b16 %v2835, %v2834
    %v2884 = vpack.c.b16 %v2837, %v2836
    %v2885 = vpack.c.b16 %v2839, %v2838
    %v2886 = vpack.c.b16 %v2841, %v2840
    %v2887 = vpack.c.b16 %v2843, %v2842
    %v2888 = vpack.c.b16 %v2845, %v2844
    %v2889 = vpack.c.b16 %v2847, %v2846
    %v2890 = vpack.c.b16 %v2849, %v2848
    %v2891 = vpack.c.b16 %v2851, %v2850
    %v2892 = vpack.c.b16 %v2853, %v2852
    %v2893 = vpack.c.b16 %v2855, %v2854
    %v2894 = vpack.c.b16 %v2857, %v2856
    %v2895 = vpack.c.b16 %v2859, %v2858
    %v2896 = vpack.c.b16 %v2861, %v2860
    %v2897 = vpack.c.b16 %v2863, %v2862
    %v2898 = vpack.c.b16 %v2865, %v2864
    %v2899 = vpack.c.b16 %v2867, %v2866
    %2932 = vmatprep.subr.bf16.mxu0 0
    %2933 = vmatpush1.bf16.msra.mxu0 %v2875
    %2934 = vmatprep.subr.bf16.mxu0 0
    %2935 = vmatpush1.bf16.msra.mxu0 %v2874
    %2936 = vmatprep.subr.bf16.mxu0 0
    %2937 = vmatpush1.bf16.msra.mxu0 %v2873
    %2938 = vmatprep.subr.bf16.mxu0 0
    %2939 = vmatpush1.bf16.msra.mxu0 %v2872
    %2940 = vmatprep.subr.bf16.mxu0 0
    %2941 = vmatpush1.bf16.msra.mxu0 %v2871
    %2942 = vmatprep.subr.bf16.mxu0 0
    %2943 = vmatpush1.bf16.msra.mxu0 %v2870
    %2944 = vmatprep.subr.bf16.mxu0 0
    %2945 = vmatpush1.bf16.msra.mxu0 %v2869
    %2946 = vmatprep.subr.bf16.mxu0 0
    %2947 = vmatpush1.bf16.msra.mxu0 %v2868
    %2948 = vmatprep.subr.bf16.mxu0 0
    %2949 = vmatpush2.bf16.msra.mxu0 %v2883
    %2950 = vmatprep.subr.bf16.mxu0 0
    %2951 = vmatpush2.bf16.msra.mxu0 %v2882
    %2952 = vmatprep.subr.bf16.mxu0 0
    %2953 = vmatpush2.bf16.msra.mxu0 %v2881
    %2954 = vmatprep.subr.bf16.mxu0 0
    %2955 = vmatpush2.bf16.msra.mxu0 %v2880
    %2956 = vmatprep.subr.bf16.mxu0 0
    %2957 = vmatpush2.bf16.msra.mxu0 %v2879
    %2958 = vmatprep.subr.bf16.mxu0 0
    %2959 = vmatpush2.bf16.msra.mxu0 %v2878
    %2960 = vmatprep.subr.bf16.mxu0 0
    %2961 = vmatpush2.bf16.msra.mxu0 %v2877
    %2962 = vmatprep.subr.bf16.mxu0 0
    %2963 = vmatpush2.bf16.msra.mxu0 %v2876
    %2964 = vmatprep.mubr.bf16.mxu0 %v2666
    %2965 = vmatmul.mubr.bf16.gmra.mxu0 %v2665
    %v2966 = vpop.f32.mrf.mxu0
    %v2967 = vadd.f32 %v2738, %v2966
    %v2968 = vpop.f32.mrf.mxu0
    %v2969 = vpop.f32.mrf.mxu0
    %v2970 = vadd.f32 %v2738, %v2969
    %v2971 = vpop.f32.mrf.mxu0
    %2972 = vdwg.mxu0
    %2973 = vmatprep.subr.bf16.mxu0 0
    %2974 = vmatpush1.bf16.msra.mxu0 %v2891
    %2975 = vmatprep.subr.bf16.mxu0 0
    %2976 = vmatpush1.bf16.msra.mxu0 %v2890
    %2977 = vmatprep.subr.bf16.mxu0 0
    %2978 = vmatpush1.bf16.msra.mxu0 %v2889
    %2979 = vmatprep.subr.bf16.mxu0 0
    %2980 = vmatpush1.bf16.msra.mxu0 %v2888
    %2981 = vmatprep.subr.bf16.mxu0 0
    %2982 = vmatpush1.bf16.msra.mxu0 %v2887
    %2983 = vmatprep.subr.bf16.mxu0 0
    %2984 = vmatpush1.bf16.msra.mxu0 %v2886
    %2985 = vmatprep.subr.bf16.mxu0 0
    %2986 = vmatpush1.bf16.msra.mxu0 %v2885
    %2987 = vmatprep.subr.bf16.mxu0 0
    %2988 = vmatpush1.bf16.msra.mxu0 %v2884
    %2989 = vmatprep.subr.bf16.mxu0 0
    %2990 = vmatpush2.bf16.msra.mxu0 %v2899
    %2991 = vmatprep.subr.bf16.mxu0 0
    %2992 = vmatpush2.bf16.msra.mxu0 %v2898
    %2993 = vmatprep.subr.bf16.mxu0 0
    %2994 = vmatpush2.bf16.msra.mxu0 %v2897
    %2995 = vmatprep.subr.bf16.mxu0 0
    %2996 = vmatpush2.bf16.msra.mxu0 %v2896
    %2997 = vmatprep.subr.bf16.mxu0 0
    %2998 = vmatpush2.bf16.msra.mxu0 %v2895
    %2999 = vmatprep.subr.bf16.mxu0 0
    %3000 = vmatpush2.bf16.msra.mxu0 %v2894
    %3001 = vmatprep.subr.bf16.mxu0 0
    %3002 = vmatpush2.bf16.msra.mxu0 %v2893
    %3003 = vmatprep.subr.bf16.mxu0 0
    %3004 = vmatpush2.bf16.msra.mxu0 %v2892
    %3005 = vmatprep.mubr.bf16.mxu0 %v2668
    %3006 = vmatmul.mubr.bf16.gmra.mxu0 %v2667
    %v3007 = vpop.f32.mrf.mxu0
    %v3008 = vadd.f32 %v2967, %v3007
    %v3009 = vpop.f32.mrf.mxu0
    %v3010 = vpop.f32.mrf.mxu0
    %v3011 = vadd.f32 %v2970, %v3010
    %v3012 = vpop.f32.mrf.mxu0
    %3013 = vdwg.mxu0
    %3014 = vst [vmem:[#allocation11] sm:$0xff] %v3008
    %3015 = vst [vmem:[#allocation11 + $0x8] sm:$0xff] %v3011
    // Predicated region
    $region50: #{tpu_custom_call.1} parent=1 // pred_check
      _
    $region51: #{tpu_custom_call.1} parent=1 // pred_check_branch
      %3017 = sbr.rel (0) target = $region53
    $region52: #{tpu_custom_call.1} parent=1 // pred_region
      %s3019 = ssub.s32 256, 256
      %3020 = vsyncadd [#allocation4], %s3019
      %s3021 = sshll.u32 [#allocation11], 4
      %s3022 = int_to_ptr.vmem [resolvable:$true] %s3021
      %3027 = dma.vmem_to_hbm [thread:$0]  %s3022, 256, %s7, [#allocation4], 128, 128, 8
    $region53: #{tpu_custom_call.1} parent=1 // pred_fallthru
      _
    // Predicated region
    $region54: #{tpu_custom_call.1} parent=1 // pred_check
      _
    $region55: #{tpu_custom_call.1} parent=1 // pred_check_branch
      %3029 = sbr.rel (0) target = $region57
    $region56: #{tpu_custom_call.1} parent=1 // pred_region
      %3030 = dma.done [#allocation4], 256
    $region57: #{tpu_custom_call.1} parent=1 // pred_fallthru
      _
    %3031 = vsyncpa [#allocation3], 1
    %3032 = vsyncpa [#allocation6], 1
    %3033 = vsyncpa [#allocation9], 1
    %3034 = vsyncpa [#allocation4], 1

</llo_original>
